<compile_context>
chip_gen: v7x
topology: tpu7x:2x2x1
jax: 0.10.0
libtpu: 0.0.40
codegen_flags: <defaults>
</compile_context>

<pallas_src>
import functools

import jax
import jax.numpy as jnp
from jax import lax
from jax.experimental import pallas as pl
from jax.experimental.pallas import tpu as pltpu


def _self_attention_kernel(xq_ref, xk_ref, wq_ref, wkv_ref, wf_ref, bf_ref,
                           o_ref, q_s, m_s, l_s, acc_s,
                           *, n_head: int, approx_recip: bool):
    """One (batch, q-tile, kv-tile) grid step of fused self-attention.

    Layouts (all 2D, lane-dense; no in-kernel head transposes):
      xq_ref : (1, TQ, D)     query rows of x          (MXU dtype)
      xk_ref : (1, TK, D)     key/value rows of x      (MXU dtype)
      wq_ref : (D, H*Dh)      1/sqrt(D) pre-folded     (MXU dtype)
      wkv_ref: (D, 2*H*Dh)    [wk | wv] fused          (MXU dtype)
      wf_ref : (H*Dh, D)      output projection        (MXU dtype)
      bf_ref : (1, D)         bias                     (f32)
      o_ref  : (1, TQ, D)
      q_s    : (TQ, H*Dh)     Q for this q-tile, persists across KV steps (MXU dtype)
      m_s,l_s: (H, TQ, 1)     online-softmax running max / sum (f32)
      acc_s  : (TQ, H*Dh)     un-normalized output accumulator (f32)
    """
    H = n_head
    ki = pl.program_id(2)
    nk = pl.num_programs(2)
    TQ, HDh = q_s.shape
    Dh = HDh // H
    mm_dtype = wq_ref.dtype

    @pl.when(ki == 0)
    def _init():
        # Fused Q projection: one wide matmul, emitted directly in the MXU operand
        # dtype (the 1/sqrt(D) scale is already folded into wq by prepare_params).
        q_s[...] = jnp.dot(xq_ref[0], wq_ref[...], preferred_element_type=mm_dtype)
        m_s[...] = jnp.full(m_s.shape, -jnp.inf, dtype=m_s.dtype)
        l_s[...] = jnp.zeros(l_s.shape, dtype=l_s.dtype)
        acc_s[...] = jnp.zeros(acc_s.shape, dtype=acc_s.dtype)

    # Fused K/V projection for this KV tile: one wide (TK, D) @ (D, 2*H*Dh) matmul.
    # TODO(synk): at production T, hoist the K/V projection into its own pass (or a
    # KV-cache input) so it is not recomputed for every query tile.
    kv = jnp.dot(xk_ref[0], wkv_ref[...], preferred_element_type=mm_dtype)

    # Per-head attention core with online softmax.  The head loop is static and
    # equivalent MXU work to a leading-batch dot_general (which unrolls per head),
    # while keeping every operand in its natural (T, H*Dh) matmul layout.
    contract_last = (((1,), (1,)), ((), ()))   # (TQ,Dh) x (TK,Dh) -> (TQ,TK)
    for h in range(H):
        lo, hi = h * Dh, (h + 1) * Dh
        qh = q_s[:, lo:hi]                      # (TQ, Dh)  MXU dtype
        kh = kv[:, lo:hi]                       # (TK, Dh)  MXU dtype
        vh = kv[:, HDh + lo:HDh + hi]           # (TK, Dh)  MXU dtype

        s = lax.dot_general(qh, kh, contract_last,
                            preferred_element_type=jnp.float32)      # (TQ, TK) f32

        m_prev = m_s[h]                                                # (TQ, 1)
        m_new = jnp.maximum(m_prev, jnp.max(s, axis=-1, keepdims=True))
        alpha = jnp.exp(m_prev - m_new)                                # (TQ, 1)
        p = jnp.exp(s - m_new)                                         # (TQ, TK) f32
        l_s[h] = alpha * l_s[h] + jnp.sum(p, axis=-1, keepdims=True)
        pv = jnp.dot(p.astype(mm_dtype), vh,
                     preferred_element_type=jnp.float32)               # (TQ, Dh) f32
        acc_s[:, lo:hi] = alpha * acc_s[:, lo:hi] + pv
        m_s[h] = m_new

    @pl.when(ki == nk - 1)
    def _finalize():
        # Deferred softmax normalization (EUP reciprocal), in place per head.
        for h in range(H):
            lo, hi = h * Dh, (h + 1) * Dh
            inv_l = pl.reciprocal(l_s[h], approx=approx_recip)         # (TQ, 1)
            acc_s[:, lo:hi] = acc_s[:, lo:hi] * inv_l
        # Fused output projection: one (TQ, H*Dh) @ (H*Dh, D) matmul (full-depth K
        # contraction on the MXU) + f32 bias; replaces per-head projections + sum.
        y = acc_s[...].astype(mm_dtype)
        out = jnp.dot(y, wf_ref[...], preferred_element_type=jnp.float32)
        out = out + bf_ref[...].astype(jnp.float32)
        o_ref[0] = out.astype(o_ref.dtype)


def prepare_params(params, n_head, compute_dtype=jnp.bfloat16):
    """One-time (parameter-load-time) weight layout prep; keep off the steady path.

    Returns (wq_scaled, wkv, wf, bf) with the softmax 1/sqrt(D) folded into wq and
    MXU operands pre-cast to `compute_dtype`.  Note this module defines
    head_dim == d_embed (q.reshape(B, T, H, D)), so the scale is exactly 1/sqrt(D).
    """
    wq, wk, wv, wf, bf = params
    D = wq.shape[0]
    assert wq.shape == (D, n_head * D) and wf.shape == (n_head * D, D)
    scale = jnp.float32(1.0 / (D ** 0.5))
    wq_s = (wq.astype(jnp.float32) * scale).astype(compute_dtype)      # (D, H*Dh)
    wkv = jnp.concatenate([wk, wv], axis=1).astype(compute_dtype)      # (D, 2*H*Dh)
    wf_c = wf.astype(compute_dtype)                                    # (H*Dh, D)
    bf_c = bf.reshape(1, D).astype(jnp.float32)                        # (1, D)
    return wq_s, wkv, wf_c, bf_c


def _vmem_limit_bytes(TQ, TK, D, HDh, H, mm_dtype, out_dtype):
    """Estimate per-step VMEM from actual block/scratch bytes; cap below v7x's 64MiB."""
    mm = jnp.dtype(mm_dtype).itemsize
    ob = jnp.dtype(out_dtype).itemsize
    f32 = 4
    est = 0
    est += 2 * TQ * D * mm + 2 * TK * D * mm          # double-buffered x blocks
    est += 2 * TQ * D * ob                            # double-buffered output block
    est += 2 * (D * HDh + D * 2 * HDh + HDh * D) * mm + 2 * 128 * f32   # weights+bias
    est += TQ * HDh * mm + TQ * HDh * f32 + 2 * H * TQ * 128 * f32      # scratch
    est += TK * 2 * HDh * mm + 3 * TQ * TK * f32      # kv / scores / probs temps
    est = int(est * 1.5) + (4 << 20)                  # compiler-internal headroom
    return max(16 << 20, min(est, 48 << 20))


def self_attention(x, prepared_params, n_head, *, block_q=128, block_k=128,
                   approx_recip=True):
    """Forward pass of the PyTorch SelfAttention module using pre-prepared weights."""
    wq_s, wkv, wf_c, bf_c = prepared_params
    B, T, D = x.shape
    H = n_head
    HDh = wq_s.shape[1]
    assert HDh == H * D, "this module has head_dim == d_embed"
    mm_dtype = wq_s.dtype
    xc = x.astype(mm_dtype)

    # Flash-style tiles.  For production keep T a multiple of the (8/16-aligned)
    # block sizes and D a multiple of 128 so output stores are lane-dense.
    TQ = block_q if (T % block_q == 0) else T
    TK = block_k if (T % block_k == 0) else T
    nq, nk = T // TQ, T // TK

    # TODO(synk): at production D (weights are H*D^2 each) the grid-resident weight
    # blocks below will not fit v7x's 64 MiB VMEM; add a K/N weight-tiling grid axis
    # or keep weights in HBM (memory_space=pl.ANY) and stream them.
    in_specs = [
        pl.BlockSpec((1, TQ, D), lambda b, qi, ki: (b, qi, 0)),    # x (query rows)
        pl.BlockSpec((1, TK, D), lambda b, qi, ki: (b, ki, 0)),    # x (key/value rows)
        pl.BlockSpec((D, HDh), lambda b, qi, ki: (0, 0)),          # wq (scaled)
        pl.BlockSpec((D, 2 * HDh), lambda b, qi, ki: (0, 0)),      # [wk | wv]
        pl.BlockSpec((HDh, D), lambda b, qi, ki: (0, 0)),          # wf
        pl.BlockSpec((1, D), lambda b, qi, ki: (0, 0)),            # bf
    ]
    out_specs = pl.BlockSpec((1, TQ, D), lambda b, qi, ki: (b, qi, 0))
    scratch_shapes = [
        pltpu.VMEM((TQ, HDh), mm_dtype),        # q for this q-tile
        pltpu.VMEM((H, TQ, 1), jnp.float32),    # running max
        pltpu.VMEM((H, TQ, 1), jnp.float32),    # running sum
        pltpu.VMEM((TQ, HDh), jnp.float32),     # output accumulator
    ]

    kernel = functools.partial(_self_attention_kernel, n_head=H,
                               approx_recip=approx_recip)
    return pl.pallas_call(
        kernel,
        out_shape=jax.ShapeDtypeStruct((B, T, D), x.dtype),
        grid_spec=pltpu.PrefetchScalarGridSpec(
            num_scalar_prefetch=0,
            grid=(B, nq, nk),
            in_specs=in_specs,
            out_specs=out_specs,
            scratch_shapes=scratch_shapes,
        ),
        compiler_params=pltpu.CompilerParams(
            # Two parallel axes (batch, query tiles) keep both v7x TensorCores busy;
            # the KV axis carries the online-softmax state and must be arbitrary.
            dimension_semantics=("parallel", "parallel", "arbitrary"),
            vmem_limit_bytes=_vmem_limit_bytes(TQ, TK, D, HDh, H, mm_dtype, x.dtype),
        ),
    )(xc, xc, wq_s, wkv, wf_c, bf_c)


def self_attention_reference(x, params, n_head):
    """Pure-JAX f32 reference of the PyTorch forward (highest matmul precision)."""
    wq, wk, wv, wf, bf = params
    B, T, D = x.shape
    H = n_head
    hp = jax.lax.Precision.HIGHEST
    q = jnp.einsum("btd,dk->btk", x, wq, precision=hp).reshape(B, T, H, D).transpose(0, 2, 1, 3)
    k = jnp.einsum("btd,dk->btk", x, wk, precision=hp).reshape(B, T, H, D).transpose(0, 2, 1, 3)
    v = jnp.einsum("btd,dk->btk", x, wv, precision=hp).reshape(B, T, H, D).transpose(0, 2, 1, 3)
    w = jnp.einsum("bhqd,bhkd->bhqk", q, k, precision=hp) / (D ** 0.5)
    w = jax.nn.softmax(w, axis=-1)
    y = jnp.einsum("bhqk,bhkd->bhqd", w, v, precision=hp)
    y = y.transpose(0, 2, 1, 3).reshape(B, T, H * D)
    return jnp.einsum("bti,ik->btk", y, wf, precision=hp) + bf


def make_params(key, n_head, d_embed):
    """Matches the PyTorch init: factor * (rand(...) - 1) with factor = 2/sqrt(D)."""
    factor = 2.0 / (d_embed ** 0.5)
    ks = jax.random.split(key, 5)
    u = lambda k, shp: factor * (jax.random.uniform(k, shp, jnp.float32) - 1.0)
    wq = u(ks[0], (d_embed, n_head * d_embed))
    wk = u(ks[1], (d_embed, n_head * d_embed))
    wv = u(ks[2], (d_embed, n_head * d_embed))
    wf = u(ks[3], (n_head * d_embed, d_embed))
    bf = u(ks[4], (d_embed,))
    return wq, wk, wv, wf, bf


if __name__ == "__main__":
    B, T, D, H = 2, 8, 32, 4
    key = jax.random.PRNGKey(0)
    kx, kp = jax.random.split(key)
    x = jax.random.normal(kx, (B, T, D), jnp.float32)
    params = make_params(kp, H, D)

    ref = jax.block_until_ready(self_attention_reference(x, params, H))

    # f32-operand debug path with exact softmax reciprocal: tight check.
    prep_f32 = prepare_params(params, H, compute_dtype=jnp.float32)
    out_f32 = jax.block_until_ready(
        self_attention(x, prep_f32, H, approx_recip=False))
    assert out_f32.shape == (B, T, D) and out_f32.dtype == x.dtype
    assert jnp.allclose(out_f32, ref, atol=5e-2, rtol=5e-2), \
        float(jnp.max(jnp.abs(out_f32 - ref)))

    # bf16 MXU-operand shipping config (approx reciprocal): looser tolerance.
    prep_bf16 = prepare_params(params, H, compute_dtype=jnp.bfloat16)
    out_bf16 = jax.block_until_ready(
        self_attention(x, prep_bf16, H, approx_recip=True))
    assert out_bf16.shape == (B, T, D) and out_bf16.dtype == x.dtype
    assert jnp.allclose(out_bf16, ref, atol=3e-1, rtol=1e-1), \
        float(jnp.max(jnp.abs(out_bf16 - ref)))

    print("KERNEL_OK")
</pallas_src>

<mosaic_0001>
module attributes {stable_mosaic.version = 11 : i64} {
  func.func @_self_attention_kernel(%arg0: i32, %arg1: i32, %arg2: i32, %arg3: memref<1x8x32xf32, #tpu.memory_space<vmem>>, %arg4: memref<1x8x32xf32, #tpu.memory_space<vmem>>, %arg5: memref<32x128xf32, #tpu.memory_space<vmem>>, %arg6: memref<32x256xf32, #tpu.memory_space<vmem>>, %arg7: memref<128x32xf32, #tpu.memory_space<vmem>>, %arg8: memref<1x32xf32, #tpu.memory_space<vmem>>, %arg9: memref<1x8x32xf32, #tpu.memory_space<vmem>>, %arg10: memref<8x128xf32, #tpu.memory_space<vmem>>, %arg11: memref<4x8x1xf32, #tpu.memory_space<vmem>>, %arg12: memref<4x8x1xf32, #tpu.memory_space<vmem>>, %arg13: memref<8x128xf32, #tpu.memory_space<vmem>>) attributes {dimension_semantics = [#tpu.dimension_semantics<parallel>, #tpu.dimension_semantics<parallel>, #tpu.dimension_semantics<arbitrary>], iteration_bounds = array<i64: 2, 1, 1>, scalar_prefetch = 0 : i64, scratch_operands = 4 : i64, tpu.core_type = #tpu.core_type<tc>, window_params = [{transform_indices = @transform_0, window_bounds = array<i64: 1, 8, 32>}, {transform_indices = @transform_1, window_bounds = array<i64: 1, 8, 32>}, {pipeline_mode = #tpu.pipeline_mode<synchronous>, transform_indices = @transform_2, window_bounds = array<i64: 32, 128>}, {pipeline_mode = #tpu.pipeline_mode<synchronous>, transform_indices = @transform_3, window_bounds = array<i64: 32, 256>}, {pipeline_mode = #tpu.pipeline_mode<synchronous>, transform_indices = @transform_4, window_bounds = array<i64: 128, 32>}, {pipeline_mode = #tpu.pipeline_mode<synchronous>, transform_indices = @transform_5, window_bounds = array<i64: 1, 32>}, {transform_indices = @transform_6, window_bounds = array<i64: 1, 8, 32>}]} {
    %c0_i32 = arith.constant 0 : i32
    %0 = arith.cmpi eq, %arg2, %c0_i32 : i32
    %1 = arith.extui %0 : i1 to i32
    %c0_i32_0 = arith.constant 0 : i32
    %2 = arith.cmpi ne, %1, %c0_i32_0 : i32
    scf.if %2 {
      %c0_89 = arith.constant 0 : index
      %c0_90 = arith.constant 0 : index
      %c0_91 = arith.constant 0 : index
      %138 = vector.load %arg3[%c0_89, %c0_90, %c0_91] : memref<1x8x32xf32, #tpu.memory_space<vmem>>, vector<1x8x32xf32>
      %139 = vector.shape_cast %138 : vector<1x8x32xf32> to vector<8x32xf32>
      %c0_92 = arith.constant 0 : index
      %c0_93 = arith.constant 0 : index
      %140 = vector.load %arg5[%c0_92, %c0_93] : memref<32x128xf32, #tpu.memory_space<vmem>>, vector<32x128xf32>
      %cst_94 = arith.constant dense<0.000000e+00> : vector<8x128xf32>
      %141 = tpu.matmul %139, %140, %cst_94 {dimension_numbers = #tpu.dot_dimension_numbers<[1], [0], [0], [1], [0, 0, 1, 1], [], []>} : vector<8x32xf32>, vector<32x128xf32>, vector<8x128xf32> -> vector<8x128xf32>
      %c0_95 = arith.constant 0 : index
      %c0_96 = arith.constant 0 : index
      %142 = vector.load %arg10[%c0_95, %c0_96] : memref<8x128xf32, #tpu.memory_space<vmem>>, vector<8x128xf32>
      tpu.vector_store %arg10[%c0_95, %c0_96], %141 {strides = array<i32>} : memref<8x128xf32, #tpu.memory_space<vmem>>, vector<8x128xf32>,
      %cst_97 = arith.constant 0xFF800000 : f32
      %143 = vector.broadcast %cst_97 : f32 to vector<4x8x1xf32>
      %c0_98 = arith.constant 0 : index
      %c0_99 = arith.constant 0 : index
      %c0_100 = arith.constant 0 : index
      %144 = vector.load %arg11[%c0_98, %c0_99, %c0_100] : memref<4x8x1xf32, #tpu.memory_space<vmem>>, vector<4x8x1xf32>
      tpu.vector_store %arg11[%c0_98, %c0_99, %c0_100], %143 {strides = array<i32>} : memref<4x8x1xf32, #tpu.memory_space<vmem>>, vector<4x8x1xf32>,
      %cst_101 = arith.constant 0.000000e+00 : f32
      %145 = vector.broadcast %cst_101 : f32 to vector<4x8x1xf32>
      %c0_102 = arith.constant 0 : index
      %c0_103 = arith.constant 0 : index
      %c0_104 = arith.constant 0 : index
      %146 = vector.load %arg12[%c0_102, %c0_103, %c0_104] : memref<4x8x1xf32, #tpu.memory_space<vmem>>, vector<4x8x1xf32>
      tpu.vector_store %arg12[%c0_102, %c0_103, %c0_104], %145 {strides = array<i32>} : memref<4x8x1xf32, #tpu.memory_space<vmem>>, vector<4x8x1xf32>,
      %cst_105 = arith.constant 0.000000e+00 : f32
      %147 = vector.broadcast %cst_105 : f32 to vector<8x128xf32>
      %c0_106 = arith.constant 0 : index
      %c0_107 = arith.constant 0 : index
      %148 = vector.load %arg13[%c0_106, %c0_107] : memref<8x128xf32, #tpu.memory_space<vmem>>, vector<8x128xf32>
      tpu.vector_store %arg13[%c0_106, %c0_107], %147 {strides = array<i32>} : memref<8x128xf32, #tpu.memory_space<vmem>>, vector<8x128xf32>,
    } else {
    }
    %c0 = arith.constant 0 : index
    %c0_1 = arith.constant 0 : index
    %c0_2 = arith.constant 0 : index
    %3 = vector.load %arg4[%c0, %c0_1, %c0_2] : memref<1x8x32xf32, #tpu.memory_space<vmem>>, vector<1x8x32xf32>
    %4 = vector.shape_cast %3 : vector<1x8x32xf32> to vector<8x32xf32>
    %c0_3 = arith.constant 0 : index
    %c0_4 = arith.constant 0 : index
    %5 = vector.load %arg6[%c0_3, %c0_4] : memref<32x256xf32, #tpu.memory_space<vmem>>, vector<32x256xf32>
    %cst = arith.constant dense<0.000000e+00> : vector<8x256xf32>
    %6 = tpu.matmul %4, %5, %cst {dimension_numbers = #tpu.dot_dimension_numbers<[1], [0], [0], [1], [0, 0, 1, 1], [], []>} : vector<8x32xf32>, vector<32x256xf32>, vector<8x256xf32> -> vector<8x256xf32>
    %c0_5 = arith.constant 0 : index
    %c0_6 = arith.constant 0 : index
    %7 = vector.load %arg10[%c0_5, %c0_6] : memref<8x128xf32, #tpu.memory_space<vmem>>, vector<8x32xf32>
    %8 = vector.extract_strided_slice %6 {offsets = [0, 0], sizes = [8, 32], strides = [1, 1]} : vector<8x256xf32> to vector<8x32xf32>
    %9 = vector.extract_strided_slice %6 {offsets = [0, 128], sizes = [8, 32], strides = [1, 1]} : vector<8x256xf32> to vector<8x32xf32>
    %cst_7 = arith.constant dense<0.000000e+00> : vector<8x8xf32>
    %10 = tpu.matmul %7, %8, %cst_7 {dimension_numbers = #tpu.dot_dimension_numbers<[1], [1], [0], [0], [0, 0, 1, 0], [], []>} : vector<8x32xf32>, vector<8x32xf32>, vector<8x8xf32> -> vector<8x8xf32>
    %c0_8 = arith.constant 0 : index
    %c0_9 = arith.constant 0 : index
    %c0_10 = arith.constant 0 : index
    %11 = vector.load %arg11[%c0_8, %c0_9, %c0_10] : memref<4x8x1xf32, #tpu.memory_space<vmem>>, vector<1x8x1xf32>
    %12 = vector.shape_cast %11 : vector<1x8x1xf32> to vector<8x1xf32>
    %cst_11 = arith.constant dense<0xFF800000> : vector<8xf32>
    %13 = vector.multi_reduction <maximumf>, %10, %cst_11 [1] : vector<8x8xf32> to vector<8xf32>
    %14 = vector.shape_cast %13 : vector<8xf32> to vector<8x1xf32>
    %15 = arith.maximumf %12, %14 : vector<8x1xf32>
    %16 = arith.subf %12, %15 : vector<8x1xf32>
    %17 = math.exp %16 : vector<8x1xf32>
    %18 = vector.broadcast %15 : vector<8x1xf32> to vector<8x8xf32>
    %19 = arith.subf %10, %18 : vector<8x8xf32>
    %20 = math.exp %19 : vector<8x8xf32>
    %c0_12 = arith.constant 0 : index
    %c0_13 = arith.constant 0 : index
    %c0_14 = arith.constant 0 : index
    %21 = vector.load %arg12[%c0_12, %c0_13, %c0_14] : memref<4x8x1xf32, #tpu.memory_space<vmem>>, vector<1x8x1xf32>
    %22 = vector.shape_cast %21 : vector<1x8x1xf32> to vector<8x1xf32>
    %23 = arith.mulf %17, %22 : vector<8x1xf32>
    %cst_15 = arith.constant dense<0.000000e+00> : vector<8xf32>
    %24 = vector.multi_reduction <add>, %20, %cst_15 [1] : vector<8x8xf32> to vector<8xf32>
    %25 = vector.shape_cast %24 : vector<8xf32> to vector<8x1xf32>
    %26 = arith.addf %23, %25 : vector<8x1xf32>
    %c0_16 = arith.constant 0 : index
    %c0_17 = arith.constant 0 : index
    %c0_18 = arith.constant 0 : index
    %27 = vector.load %arg12[%c0_16, %c0_17, %c0_18] : memref<4x8x1xf32, #tpu.memory_space<vmem>>, vector<1x8x1xf32>
    %28 = vector.shape_cast %27 : vector<1x8x1xf32> to vector<8x1xf32>
    %29 = vector.shape_cast %26 : vector<8x1xf32> to vector<1x8x1xf32>
    tpu.vector_store %arg12[%c0_16, %c0_17, %c0_18], %29 {strides = array<i32>} : memref<4x8x1xf32, #tpu.memory_space<vmem>>, vector<1x8x1xf32>,
    %cst_19 = arith.constant dense<0.000000e+00> : vector<8x32xf32>
    %30 = tpu.matmul %20, %9, %cst_19 {dimension_numbers = #tpu.dot_dimension_numbers<[1], [0], [0], [1], [0, 0, 1, 1], [], []>} : vector<8x8xf32>, vector<8x32xf32>, vector<8x32xf32> -> vector<8x32xf32>
    %c0_20 = arith.constant 0 : index
    %c0_21 = arith.constant 0 : index
    %31 = vector.load %arg13[%c0_20, %c0_21] : memref<8x128xf32, #tpu.memory_space<vmem>>, vector<8x32xf32>
    %32 = vector.broadcast %17 : vector<8x1xf32> to vector<8x32xf32>
    %33 = arith.mulf %32, %31 : vector<8x32xf32>
    %34 = arith.addf %33, %30 : vector<8x32xf32>
    %c0_22 = arith.constant 0 : index
    %c0_23 = arith.constant 0 : index
    %35 = vector.load %arg13[%c0_22, %c0_23] : memref<8x128xf32, #tpu.memory_space<vmem>>, vector<8x32xf32>
    tpu.vector_store %arg13[%c0_22, %c0_23], %34 {strides = array<i32>} : memref<8x128xf32, #tpu.memory_space<vmem>>, vector<8x32xf32>,
    %c0_24 = arith.constant 0 : index
    %c0_25 = arith.constant 0 : index
    %c0_26 = arith.constant 0 : index
    %36 = vector.load %arg11[%c0_24, %c0_25, %c0_26] : memref<4x8x1xf32, #tpu.memory_space<vmem>>, vector<1x8x1xf32>
    %37 = vector.shape_cast %36 : vector<1x8x1xf32> to vector<8x1xf32>
    %38 = vector.shape_cast %15 : vector<8x1xf32> to vector<1x8x1xf32>
    tpu.vector_store %arg11[%c0_24, %c0_25, %c0_26], %38 {strides = array<i32>} : memref<4x8x1xf32, #tpu.memory_space<vmem>>, vector<1x8x1xf32>,
    %c0_27 = arith.constant 0 : index
    %c32 = arith.constant 32 : index
    %39 = vector.load %arg10[%c0_27, %c32] : memref<8x128xf32, #tpu.memory_space<vmem>>, vector<8x32xf32>
    %40 = vector.extract_strided_slice %6 {offsets = [0, 32], sizes = [8, 32], strides = [1, 1]} : vector<8x256xf32> to vector<8x32xf32>
    %41 = vector.extract_strided_slice %6 {offsets = [0, 160], sizes = [8, 32], strides = [1, 1]} : vector<8x256xf32> to vector<8x32xf32>
    %cst_28 = arith.constant dense<0.000000e+00> : vector<8x8xf32>
    %42 = tpu.matmul %39, %40, %cst_28 {dimension_numbers = #tpu.dot_dimension_numbers<[1], [1], [0], [0], [0, 0, 1, 0], [], []>} : vector<8x32xf32>, vector<8x32xf32>, vector<8x8xf32> -> vector<8x8xf32>
    %c1 = arith.constant 1 : index
    %c0_29 = arith.constant 0 : index
    %c0_30 = arith.constant 0 : index
    %43 = vector.load %arg11[%c1, %c0_29, %c0_30] : memref<4x8x1xf32, #tpu.memory_space<vmem>>, vector<1x8x1xf32>
    %44 = vector.shape_cast %43 : vector<1x8x1xf32> to vector<8x1xf32>
    %cst_31 = arith.constant dense<0xFF800000> : vector<8xf32>
    %45 = vector.multi_reduction <maximumf>, %42, %cst_31 [1] : vector<8x8xf32> to vector<8xf32>
    %46 = vector.shape_cast %45 : vector<8xf32> to vector<8x1xf32>
    %47 = arith.maximumf %44, %46 : vector<8x1xf32>
    %48 = arith.subf %44, %47 : vector<8x1xf32>
    %49 = math.exp %48 : vector<8x1xf32>
    %50 = vector.broadcast %47 : vector<8x1xf32> to vector<8x8xf32>
    %51 = arith.subf %42, %50 : vector<8x8xf32>
    %52 = math.exp %51 : vector<8x8xf32>
    %c1_32 = arith.constant 1 : index
    %c0_33 = arith.constant 0 : index
    %c0_34 = arith.constant 0 : index
    %53 = vector.load %arg12[%c1_32, %c0_33, %c0_34] : memref<4x8x1xf32, #tpu.memory_space<vmem>>, vector<1x8x1xf32>
    %54 = vector.shape_cast %53 : vector<1x8x1xf32> to vector<8x1xf32>
    %55 = arith.mulf %49, %54 : vector<8x1xf32>
    %cst_35 = arith.constant dense<0.000000e+00> : vector<8xf32>
    %56 = vector.multi_reduction <add>, %52, %cst_35 [1] : vector<8x8xf32> to vector<8xf32>
    %57 = vector.shape_cast %56 : vector<8xf32> to vector<8x1xf32>
    %58 = arith.addf %55, %57 : vector<8x1xf32>
    %c1_36 = arith.constant 1 : index
    %c0_37 = arith.constant 0 : index
    %c0_38 = arith.constant 0 : index
    %59 = vector.load %arg12[%c1_36, %c0_37, %c0_38] : memref<4x8x1xf32, #tpu.memory_space<vmem>>, vector<1x8x1xf32>
    %60 = vector.shape_cast %59 : vector<1x8x1xf32> to vector<8x1xf32>
    %61 = vector.shape_cast %58 : vector<8x1xf32> to vector<1x8x1xf32>
    tpu.vector_store %arg12[%c1_36, %c0_37, %c0_38], %61 {strides = array<i32>} : memref<4x8x1xf32, #tpu.memory_space<vmem>>, vector<1x8x1xf32>,
    %cst_39 = arith.constant dense<0.000000e+00> : vector<8x32xf32>
    %62 = tpu.matmul %52, %41, %cst_39 {dimension_numbers = #tpu.dot_dimension_numbers<[1], [0], [0], [1], [0, 0, 1, 1], [], []>} : vector<8x8xf32>, vector<8x32xf32>, vector<8x32xf32> -> vector<8x32xf32>
    %c0_40 = arith.constant 0 : index
    %c32_41 = arith.constant 32 : index
    %63 = vector.load %arg13[%c0_40, %c32_41] : memref<8x128xf32, #tpu.memory_space<vmem>>, vector<8x32xf32>
    %64 = vector.broadcast %49 : vector<8x1xf32> to vector<8x32xf32>
    %65 = arith.mulf %64, %63 : vector<8x32xf32>
    %66 = arith.addf %65, %62 : vector<8x32xf32>
    %c0_42 = arith.constant 0 : index
    %c32_43 = arith.constant 32 : index
    %67 = vector.load %arg13[%c0_42, %c32_43] : memref<8x128xf32, #tpu.memory_space<vmem>>, vector<8x32xf32>
    tpu.vector_store %arg13[%c0_42, %c32_43], %66 {strides = array<i32>} : memref<8x128xf32, #tpu.memory_space<vmem>>, vector<8x32xf32>,
    %c1_44 = arith.constant 1 : index
    %c0_45 = arith.constant 0 : index
    %c0_46 = arith.constant 0 : index
    %68 = vector.load %arg11[%c1_44, %c0_45, %c0_46] : memref<4x8x1xf32, #tpu.memory_space<vmem>>, vector<1x8x1xf32>
    %69 = vector.shape_cast %68 : vector<1x8x1xf32> to vector<8x1xf32>
    %70 = vector.shape_cast %47 : vector<8x1xf32> to vector<1x8x1xf32>
    tpu.vector_store %arg11[%c1_44, %c0_45, %c0_46], %70 {strides = array<i32>} : memref<4x8x1xf32, #tpu.memory_space<vmem>>, vector<1x8x1xf32>,
    %c0_47 = arith.constant 0 : index
    %c64 = arith.constant 64 : index
    %71 = vector.load %arg10[%c0_47, %c64] : memref<8x128xf32, #tpu.memory_space<vmem>>, vector<8x32xf32>
    %72 = vector.extract_strided_slice %6 {offsets = [0, 64], sizes = [8, 32], strides = [1, 1]} : vector<8x256xf32> to vector<8x32xf32>
    %73 = vector.extract_strided_slice %6 {offsets = [0, 192], sizes = [8, 32], strides = [1, 1]} : vector<8x256xf32> to vector<8x32xf32>
    %cst_48 = arith.constant dense<0.000000e+00> : vector<8x8xf32>
    %74 = tpu.matmul %71, %72, %cst_48 {dimension_numbers = #tpu.dot_dimension_numbers<[1], [1], [0], [0], [0, 0, 1, 0], [], []>} : vector<8x32xf32>, vector<8x32xf32>, vector<8x8xf32> -> vector<8x8xf32>
    %c2 = arith.constant 2 : index
    %c0_49 = arith.constant 0 : index
    %c0_50 = arith.constant 0 : index
    %75 = vector.load %arg11[%c2, %c0_49, %c0_50] : memref<4x8x1xf32, #tpu.memory_space<vmem>>, vector<1x8x1xf32>
    %76 = vector.shape_cast %75 : vector<1x8x1xf32> to vector<8x1xf32>
    %cst_51 = arith.constant dense<0xFF800000> : vector<8xf32>
    %77 = vector.multi_reduction <maximumf>, %74, %cst_51 [1] : vector<8x8xf32> to vector<8xf32>
    %78 = vector.shape_cast %77 : vector<8xf32> to vector<8x1xf32>
    %79 = arith.maximumf %76, %78 : vector<8x1xf32>
    %80 = arith.subf %76, %79 : vector<8x1xf32>
    %81 = math.exp %80 : vector<8x1xf32>
    %82 = vector.broadcast %79 : vector<8x1xf32> to vector<8x8xf32>
    %83 = arith.subf %74, %82 : vector<8x8xf32>
    %84 = math.exp %83 : vector<8x8xf32>
    %c2_52 = arith.constant 2 : index
    %c0_53 = arith.constant 0 : index
    %c0_54 = arith.constant 0 : index
    %85 = vector.load %arg12[%c2_52, %c0_53, %c0_54] : memref<4x8x1xf32, #tpu.memory_space<vmem>>, vector<1x8x1xf32>
    %86 = vector.shape_cast %85 : vector<1x8x1xf32> to vector<8x1xf32>
    %87 = arith.mulf %81, %86 : vector<8x1xf32>
    %cst_55 = arith.constant dense<0.000000e+00> : vector<8xf32>
    %88 = vector.multi_reduction <add>, %84, %cst_55 [1] : vector<8x8xf32> to vector<8xf32>
    %89 = vector.shape_cast %88 : vector<8xf32> to vector<8x1xf32>
    %90 = arith.addf %87, %89 : vector<8x1xf32>
    %c2_56 = arith.constant 2 : index
    %c0_57 = arith.constant 0 : index
    %c0_58 = arith.constant 0 : index
    %91 = vector.load %arg12[%c2_56, %c0_57, %c0_58] : memref<4x8x1xf32, #tpu.memory_space<vmem>>, vector<1x8x1xf32>
    %92 = vector.shape_cast %91 : vector<1x8x1xf32> to vector<8x1xf32>
    %93 = vector.shape_cast %90 : vector<8x1xf32> to vector<1x8x1xf32>
    tpu.vector_store %arg12[%c2_56, %c0_57, %c0_58], %93 {strides = array<i32>} : memref<4x8x1xf32, #tpu.memory_space<vmem>>, vector<1x8x1xf32>,
    %cst_59 = arith.constant dense<0.000000e+00> : vector<8x32xf32>
    %94 = tpu.matmul %84, %73, %cst_59 {dimension_numbers = #tpu.dot_dimension_numbers<[1], [0], [0], [1], [0, 0, 1, 1], [], []>} : vector<8x8xf32>, vector<8x32xf32>, vector<8x32xf32> -> vector<8x32xf32>
    %c0_60 = arith.constant 0 : index
    %c64_61 = arith.constant 64 : index
    %95 = vector.load %arg13[%c0_60, %c64_61] : memref<8x128xf32, #tpu.memory_space<vmem>>, vector<8x32xf32>
    %96 = vector.broadcast %81 : vector<8x1xf32> to vector<8x32xf32>
    %97 = arith.mulf %96, %95 : vector<8x32xf32>
    %98 = arith.addf %97, %94 : vector<8x32xf32>
    %c0_62 = arith.constant 0 : index
    %c64_63 = arith.constant 64 : index
    %99 = vector.load %arg13[%c0_62, %c64_63] : memref<8x128xf32, #tpu.memory_space<vmem>>, vector<8x32xf32>
    tpu.vector_store %arg13[%c0_62, %c64_63], %98 {strides = array<i32>} : memref<8x128xf32, #tpu.memory_space<vmem>>, vector<8x32xf32>,
    %c2_64 = arith.constant 2 : index
    %c0_65 = arith.constant 0 : index
    %c0_66 = arith.constant 0 : index
    %100 = vector.load %arg11[%c2_64, %c0_65, %c0_66] : memref<4x8x1xf32, #tpu.memory_space<vmem>>, vector<1x8x1xf32>
    %101 = vector.shape_cast %100 : vector<1x8x1xf32> to vector<8x1xf32>
    %102 = vector.shape_cast %79 : vector<8x1xf32> to vector<1x8x1xf32>
    tpu.vector_store %arg11[%c2_64, %c0_65, %c0_66], %102 {strides = array<i32>} : memref<4x8x1xf32, #tpu.memory_space<vmem>>, vector<1x8x1xf32>,
    %c0_67 = arith.constant 0 : index
    %c96 = arith.constant 96 : index
    %103 = vector.load %arg10[%c0_67, %c96] : memref<8x128xf32, #tpu.memory_space<vmem>>, vector<8x32xf32>
    %104 = vector.extract_strided_slice %6 {offsets = [0, 96], sizes = [8, 32], strides = [1, 1]} : vector<8x256xf32> to vector<8x32xf32>
    %105 = vector.extract_strided_slice %6 {offsets = [0, 224], sizes = [8, 32], strides = [1, 1]} : vector<8x256xf32> to vector<8x32xf32>
    %cst_68 = arith.constant dense<0.000000e+00> : vector<8x8xf32>
    %106 = tpu.matmul %103, %104, %cst_68 {dimension_numbers = #tpu.dot_dimension_numbers<[1], [1], [0], [0], [0, 0, 1, 0], [], []>} : vector<8x32xf32>, vector<8x32xf32>, vector<8x8xf32> -> vector<8x8xf32>
    %c3 = arith.constant 3 : index
    %c0_69 = arith.constant 0 : index
    %c0_70 = arith.constant 0 : index
    %107 = vector.load %arg11[%c3, %c0_69, %c0_70] : memref<4x8x1xf32, #tpu.memory_space<vmem>>, vector<1x8x1xf32>
    %108 = vector.shape_cast %107 : vector<1x8x1xf32> to vector<8x1xf32>
    %cst_71 = arith.constant dense<0xFF800000> : vector<8xf32>
    %109 = vector.multi_reduction <maximumf>, %106, %cst_71 [1] : vector<8x8xf32> to vector<8xf32>
    %110 = vector.shape_cast %109 : vector<8xf32> to vector<8x1xf32>
    %111 = arith.maximumf %108, %110 : vector<8x1xf32>
    %112 = arith.subf %108, %111 : vector<8x1xf32>
    %113 = math.exp %112 : vector<8x1xf32>
    %114 = vector.broadcast %111 : vector<8x1xf32> to vector<8x8xf32>
    %115 = arith.subf %106, %114 : vector<8x8xf32>
    %116 = math.exp %115 : vector<8x8xf32>
    %c3_72 = arith.constant 3 : index
    %c0_73 = arith.constant 0 : index
    %c0_74 = arith.constant 0 : index
    %117 = vector.load %arg12[%c3_72, %c0_73, %c0_74] : memref<4x8x1xf32, #tpu.memory_space<vmem>>, vector<1x8x1xf32>
    %118 = vector.shape_cast %117 : vector<1x8x1xf32> to vector<8x1xf32>
    %119 = arith.mulf %113, %118 : vector<8x1xf32>
    %cst_75 = arith.constant dense<0.000000e+00> : vector<8xf32>
    %120 = vector.multi_reduction <add>, %116, %cst_75 [1] : vector<8x8xf32> to vector<8xf32>
    %121 = vector.shape_cast %120 : vector<8xf32> to vector<8x1xf32>
    %122 = arith.addf %119, %121 : vector<8x1xf32>
    %c3_76 = arith.constant 3 : index
    %c0_77 = arith.constant 0 : index
    %c0_78 = arith.constant 0 : index
    %123 = vector.load %arg12[%c3_76, %c0_77, %c0_78] : memref<4x8x1xf32, #tpu.memory_space<vmem>>, vector<1x8x1xf32>
    %124 = vector.shape_cast %123 : vector<1x8x1xf32> to vector<8x1xf32>
    %125 = vector.shape_cast %122 : vector<8x1xf32> to vector<1x8x1xf32>
    tpu.vector_store %arg12[%c3_76, %c0_77, %c0_78], %125 {strides = array<i32>} : memref<4x8x1xf32, #tpu.memory_space<vmem>>, vector<1x8x1xf32>,
    %cst_79 = arith.constant dense<0.000000e+00> : vector<8x32xf32>
    %126 = tpu.matmul %116, %105, %cst_79 {dimension_numbers = #tpu.dot_dimension_numbers<[1], [0], [0], [1], [0, 0, 1, 1], [], []>} : vector<8x8xf32>, vector<8x32xf32>, vector<8x32xf32> -> vector<8x32xf32>
    %c0_80 = arith.constant 0 : index
    %c96_81 = arith.constant 96 : index
    %127 = vector.load %arg13[%c0_80, %c96_81] : memref<8x128xf32, #tpu.memory_space<vmem>>, vector<8x32xf32>
    %128 = vector.broadcast %113 : vector<8x1xf32> to vector<8x32xf32>
    %129 = arith.mulf %128, %127 : vector<8x32xf32>
    %130 = arith.addf %129, %126 : vector<8x32xf32>
    %c0_82 = arith.constant 0 : index
    %c96_83 = arith.constant 96 : index
    %131 = vector.load %arg13[%c0_82, %c96_83] : memref<8x128xf32, #tpu.memory_space<vmem>>, vector<8x32xf32>
    tpu.vector_store %arg13[%c0_82, %c96_83], %130 {strides = array<i32>} : memref<8x128xf32, #tpu.memory_space<vmem>>, vector<8x32xf32>,
    %c3_84 = arith.constant 3 : index
    %c0_85 = arith.constant 0 : index
    %c0_86 = arith.constant 0 : index
    %132 = vector.load %arg11[%c3_84, %c0_85, %c0_86] : memref<4x8x1xf32, #tpu.memory_space<vmem>>, vector<1x8x1xf32>
    %133 = vector.shape_cast %132 : vector<1x8x1xf32> to vector<8x1xf32>
    %134 = vector.shape_cast %111 : vector<8x1xf32> to vector<1x8x1xf32>
    tpu.vector_store %arg11[%c3_84, %c0_85, %c0_86], %134 {strides = array<i32>} : memref<4x8x1xf32, #tpu.memory_space<vmem>>, vector<1x8x1xf32>,
    %c0_i32_87 = arith.constant 0 : i32
    %135 = arith.cmpi eq, %arg2, %c0_i32_87 : i32
    %136 = arith.extui %135 : i1 to i32
    %c0_i32_88 = arith.constant 0 : i32
    %137 = arith.cmpi ne, %136, %c0_i32_88 : i32
    scf.if %137 {
      %c0_89 = arith.constant 0 : index
      %c0_90 = arith.constant 0 : index
      %c0_91 = arith.constant 0 : index
      %138 = vector.load %arg12[%c0_89, %c0_90, %c0_91] : memref<4x8x1xf32, #tpu.memory_space<vmem>>, vector<1x8x1xf32>
      %139 = vector.shape_cast %138 : vector<1x8x1xf32> to vector<8x1xf32>
      %140 = tpu.reciprocal %139 : vector<8x1xf32> -> vector<8x1xf32>
      %c0_92 = arith.constant 0 : index
      %c0_93 = arith.constant 0 : index
      %141 = vector.load %arg13[%c0_92, %c0_93] : memref<8x128xf32, #tpu.memory_space<vmem>>, vector<8x32xf32>
      %142 = vector.broadcast %140 : vector<8x1xf32> to vector<8x32xf32>
      %143 = arith.mulf %141, %142 : vector<8x32xf32>
      %c0_94 = arith.constant 0 : index
      %c0_95 = arith.constant 0 : index
      %144 = vector.load %arg13[%c0_94, %c0_95] : memref<8x128xf32, #tpu.memory_space<vmem>>, vector<8x32xf32>
      tpu.vector_store %arg13[%c0_94, %c0_95], %143 {strides = array<i32>} : memref<8x128xf32, #tpu.memory_space<vmem>>, vector<8x32xf32>,
      %c1_96 = arith.constant 1 : index
      %c0_97 = arith.constant 0 : index
      %c0_98 = arith.constant 0 : index
      %145 = vector.load %arg12[%c1_96, %c0_97, %c0_98] : memref<4x8x1xf32, #tpu.memory_space<vmem>>, vector<1x8x1xf32>
      %146 = vector.shape_cast %145 : vector<1x8x1xf32> to vector<8x1xf32>
      %147 = tpu.reciprocal %146 : vector<8x1xf32> -> vector<8x1xf32>
      %c0_99 = arith.constant 0 : index
      %c32_100 = arith.constant 32 : index
      %148 = vector.load %arg13[%c0_99, %c32_100] : memref<8x128xf32, #tpu.memory_space<vmem>>, vector<8x32xf32>
      %149 = vector.broadcast %147 : vector<8x1xf32> to vector<8x32xf32>
      %150 = arith.mulf %148, %149 : vector<8x32xf32>
      %c0_101 = arith.constant 0 : index
      %c32_102 = arith.constant 32 : index
      %151 = vector.load %arg13[%c0_101, %c32_102] : memref<8x128xf32, #tpu.memory_space<vmem>>, vector<8x32xf32>
      tpu.vector_store %arg13[%c0_101, %c32_102], %150 {strides = array<i32>} : memref<8x128xf32, #tpu.memory_space<vmem>>, vector<8x32xf32>,
      %c2_103 = arith.constant 2 : index
      %c0_104 = arith.constant 0 : index
      %c0_105 = arith.constant 0 : index
      %152 = vector.load %arg12[%c2_103, %c0_104, %c0_105] : memref<4x8x1xf32, #tpu.memory_space<vmem>>, vector<1x8x1xf32>
      %153 = vector.shape_cast %152 : vector<1x8x1xf32> to vector<8x1xf32>
      %154 = tpu.reciprocal %153 : vector<8x1xf32> -> vector<8x1xf32>
      %c0_106 = arith.constant 0 : index
      %c64_107 = arith.constant 64 : index
      %155 = vector.load %arg13[%c0_106, %c64_107] : memref<8x128xf32, #tpu.memory_space<vmem>>, vector<8x32xf32>
      %156 = vector.broadcast %154 : vector<8x1xf32> to vector<8x32xf32>
      %157 = arith.mulf %155, %156 : vector<8x32xf32>
      %c0_108 = arith.constant 0 : index
      %c64_109 = arith.constant 64 : index
      %158 = vector.load %arg13[%c0_108, %c64_109] : memref<8x128xf32, #tpu.memory_space<vmem>>, vector<8x32xf32>
      tpu.vector_store %arg13[%c0_108, %c64_109], %157 {strides = array<i32>} : memref<8x128xf32, #tpu.memory_space<vmem>>, vector<8x32xf32>,
      %c3_110 = arith.constant 3 : index
      %c0_111 = arith.constant 0 : index
      %c0_112 = arith.constant 0 : index
      %159 = vector.load %arg12[%c3_110, %c0_111, %c0_112] : memref<4x8x1xf32, #tpu.memory_space<vmem>>, vector<1x8x1xf32>
      %160 = vector.shape_cast %159 : vector<1x8x1xf32> to vector<8x1xf32>
      %161 = tpu.reciprocal %160 : vector<8x1xf32> -> vector<8x1xf32>
      %c0_113 = arith.constant 0 : index
      %c96_114 = arith.constant 96 : index
      %162 = vector.load %arg13[%c0_113, %c96_114] : memref<8x128xf32, #tpu.memory_space<vmem>>, vector<8x32xf32>
      %163 = vector.broadcast %161 : vector<8x1xf32> to vector<8x32xf32>
      %164 = arith.mulf %162, %163 : vector<8x32xf32>
      %c0_115 = arith.constant 0 : index
      %c96_116 = arith.constant 96 : index
      %165 = vector.load %arg13[%c0_115, %c96_116] : memref<8x128xf32, #tpu.memory_space<vmem>>, vector<8x32xf32>
      tpu.vector_store %arg13[%c0_115, %c96_116], %164 {strides = array<i32>} : memref<8x128xf32, #tpu.memory_space<vmem>>, vector<8x32xf32>,
      %c0_117 = arith.constant 0 : index
      %c0_118 = arith.constant 0 : index
      %166 = vector.load %arg13[%c0_117, %c0_118] : memref<8x128xf32, #tpu.memory_space<vmem>>, vector<8x128xf32>
      %c0_119 = arith.constant 0 : index
      %c0_120 = arith.constant 0 : index
      %167 = vector.load %arg7[%c0_119, %c0_120] : memref<128x32xf32, #tpu.memory_space<vmem>>, vector<128x32xf32>
      %cst_121 = arith.constant dense<0.000000e+00> : vector<8x32xf32>
      %168 = tpu.matmul %166, %167, %cst_121 {dimension_numbers = #tpu.dot_dimension_numbers<[1], [0], [0], [1], [0, 0, 1, 1], [], []>} : vector<8x128xf32>, vector<128x32xf32>, vector<8x32xf32> -> vector<8x32xf32>
      %c0_122 = arith.constant 0 : index
      %c0_123 = arith.constant 0 : index
      %169 = vector.load %arg8[%c0_122, %c0_123] : memref<1x32xf32, #tpu.memory_space<vmem>>, vector<1x32xf32>
      %170 = vector.broadcast %169 : vector<1x32xf32> to vector<8x32xf32>
      %171 = arith.addf %168, %170 : vector<8x32xf32>
      %c0_124 = arith.constant 0 : index
      %c0_125 = arith.constant 0 : index
      %c0_126 = arith.constant 0 : index
      %172 = vector.load %arg9[%c0_124, %c0_125, %c0_126] : memref<1x8x32xf32, #tpu.memory_space<vmem>>, vector<1x8x32xf32>
      %173 = vector.shape_cast %172 : vector<1x8x32xf32> to vector<8x32xf32>
      %174 = vector.shape_cast %171 : vector<8x32xf32> to vector<1x8x32xf32>
      tpu.vector_store %arg9[%c0_124, %c0_125, %c0_126], %174 {strides = array<i32>} : memref<1x8x32xf32, #tpu.memory_space<vmem>>, vector<1x8x32xf32>,
    } else {
    }
    return
  }
  func.func @transform_0(%arg0: i32, %arg1: i32, %arg2: i32) -> (i32, i32, i32) {
    %c0_i32 = arith.constant 0 : i32
    %c0_i32_0 = arith.constant 0 : i32
    return %arg0, %arg1, %c0_i32 : i32, i32, i32
  }
  func.func @transform_1(%arg0: i32, %arg1: i32, %arg2: i32) -> (i32, i32, i32) {
    %c0_i32 = arith.constant 0 : i32
    %c0_i32_0 = arith.constant 0 : i32
    return %arg0, %arg2, %c0_i32 : i32, i32, i32
  }
  func.func @transform_2(%arg0: i32, %arg1: i32, %arg2: i32) -> (i32, i32) {
    %c0_i32 = arith.constant 0 : i32
    %c0_i32_0 = arith.constant 0 : i32
    %c0_i32_1 = arith.constant 0 : i32
    return %c0_i32, %c0_i32_0 : i32, i32
  }
  func.func @transform_3(%arg0: i32, %arg1: i32, %arg2: i32) -> (i32, i32) {
    %c0_i32 = arith.constant 0 : i32
    %c0_i32_0 = arith.constant 0 : i32
    %c0_i32_1 = arith.constant 0 : i32
    return %c0_i32, %c0_i32_0 : i32, i32
  }
  func.func @transform_4(%arg0: i32, %arg1: i32, %arg2: i32) -> (i32, i32) {
    %c0_i32 = arith.constant 0 : i32
    %c0_i32_0 = arith.constant 0 : i32
    %c0_i32_1 = arith.constant 0 : i32
    return %c0_i32, %c0_i32_0 : i32, i32
  }
  func.func @transform_5(%arg0: i32, %arg1: i32, %arg2: i32) -> (i32, i32) {
    %c0_i32 = arith.constant 0 : i32
    %c0_i32_0 = arith.constant 0 : i32
    %c0_i32_1 = arith.constant 0 : i32
    return %c0_i32, %c0_i32_0 : i32, i32
  }
  func.func @transform_6(%arg0: i32, %arg1: i32, %arg2: i32) -> (i32, i32, i32) {
    %c0_i32 = arith.constant 0 : i32
    %c0_i32_0 = arith.constant 0 : i32
    return %arg0, %arg1, %c0_i32 : i32, i32, i32
  }
}

</mosaic_0001>

<llo_original>
// kernel: tpu_custom_call.1
$region0: #{tpu_custom_call.1}
  #allocation0 [shape = 'u32[]', space=smem, size = 0x4, offset = 0x4, fixed_abs, tag = 'smem constant byte address 0x4 - core index']
  #allocation1 [shape = 'u32[144,128]{1,0:T(1,128)}', space=vmem, size = 0x12000, scoped, tag = 'internal scratch']
  #allocation2 [shape = 'f32[8,128]{1,0:T(8,128)}', space=vmem, size = 0x1000, scoped, tag = 'scratch operand']
  #allocation3 [shape = 'f32[4,8,1]{2,1,0:T(8,128)}', space=vmem, size = 0x4000, scoped, tag = 'scratch operand']
  #allocation4 [shape = 'f32[4,8,1]{2,1,0:T(8,128)}', space=vmem, size = 0x4000, scoped, tag = 'scratch operand']
  #allocation5 [shape = 'f32[8,128]{1,0:T(8,128)}', space=vmem, size = 0x1000, scoped, tag = 'scratch operand']
  %s0 = inlined_call_operand.vmem [shape: f32[2,8,32], index: 0, kind: input, shape index: {}]
  %s1 = inlined_call_operand.vmem [shape: f32[2,8,32], index: 1, kind: input, shape index: {}]
  %s2 = inlined_call_operand.vmem [shape: f32[32,128], index: 2, kind: input, shape index: {}]
  %s3 = inlined_call_operand.vmem [shape: f32[32,256], index: 3, kind: input, shape index: {}]
  %s4 = inlined_call_operand.vmem [shape: f32[128,32], index: 4, kind: input, shape index: {}]
  %s5 = inlined_call_operand.vmem [shape: f32[1,32], index: 5, kind: input, shape index: {}]
  %s6 = inlined_call_operand.hbm [shape: f32[2,8,32], index: 6, kind: output, shape index: {}]
  %s7 = sld [smem:[#allocation0]]
  $region65: #{tpu_custom_call.1} parent=0
    _
  %s9 = ssub.s32 1, %s7
  %s10 = scalar_select 0, %s9, %s7
  $region1: #{tpu_custom_call.1} parent=0
    #allocation6 [shape = 'u8[8192]{0}', space=vmem, size = 0x2000, scoped, tag = 'output window, operand 0']
    #allocation7 [shape = 's32[2]{0}', space=sflag, size = 0x8, scoped, tag = 'scoped memory for tpu_custom_call.1']
    %11 = vsyncpa [#allocation7], 0
    %s12 = scalar_lea.sflag [#allocation7], 1
    %13 = vsyncpa %s12, 0
    loop: start=0, step=1, limit=4
    $region2: #{tpu_custom_call.1} parent=1 // loop_pre_header
      _
    $region3: #{tpu_custom_call.1} parent=1 // loop_header
      %s15 = sphi 0, %s19
      %p16 = scmp.ge.s32.totalorder %s15, 4
      %s22 = sphi 0, %s41
      %s23 = sphi 0, %s37
      %s24 = sphi 0, %s33
      %s25 = sphi 0, %s22
      %s26 = sphi 0, %s23
      %s27 = sphi 0, %s24
      %s28 = sphi 0, %s25
      %s29 = sphi 0, %s26
      %s30 = sphi 0, %s27
      %s46 = sphi 0, %s48
      %s49 = sphi 0, %s46
      %s50 = sphi 0, %s49
      %s66 = sphi 0, %s50
      %s74 = sphi 0, %s76
      %s77 = sphi 0, %s74
      %s78 = sphi 0, %s77
      %s94 = sphi 0, %s78
      %s98 = sphi 0, %s98
      %s100 = sphi 0, %s98
      %s101 = sphi 0, %s100
      %s115 = sphi 0, %s101
      %s119 = sphi 0, %s119
      %s121 = sphi 0, %s119
      %s122 = sphi 0, %s121
      %s136 = sphi 0, %s122
      %s140 = sphi 0, %s140
      %s142 = sphi 0, %s140
      %s143 = sphi 0, %s142
      %s157 = sphi 0, %s143
      %s161 = sphi 0, %s161
      %s163 = sphi 0, %s161
      %s164 = sphi 0, %s163
      %s178 = sphi 0, %s164
      %s186 = sphi 0, %s188
      %s189 = sphi 0, %s186
      %s190 = sphi 0, %s189
      %s206 = sphi 0, %s190
    $region4: #{tpu_custom_call.1} parent=1 // loop_header_branch
      %18 = sbr.rel (%p16) target = $region8
    $region5: #{tpu_custom_call.1} parent=1 // loop_body
      %s20 = ssub.s32 %s15, 1
      %s21 = ssub.s32 %s15, 2
      %s31 = sadd.s32 1, %s24
      %p32 = scmp.ge.s32.totalorder %s31, 1
      %s33 = scalar_select %p32, 0, %s31
      %s34 = sadd.s32 1, %s23
      %s35 = scalar_select %p32, %s34, %s23
      %p36 = scmp.ge.s32.totalorder %s35, 1
      %s37 = scalar_select %p36, 0, %s35
      %s38 = sadd.s32 1, %s22
      %s39 = scalar_select %p36, %s38, %s22
      %p40 = scmp.ge.s32.totalorder %s39, 2
      %s41 = scalar_select %p40, 0, %s39
      %s42 = ssub.s32 %s22, %s41
      %s43 = ssub.s32 %s23, %s37
      %s44 = sor.u32 %s42, %s43
      %p45 = scmp.eq.s32.totalorder %s44, 0
      %s47 = sadd.s32 %s46, 1
      %s48 = scalar_select %p45, %s46, %s47
      %p51 = pneg %p45
      %p52 = scmp.eq.s32.totalorder %s15, 1
      %p53 = por %p51, %p52
      %p54 = scmp.ne.s32.totalorder %s46, %s49
      %p55 = scmp.eq.s32.totalorder %s15, 0
      %p56 = por %p54, %p55
      %p57 = scmp.ne.s32.totalorder %s46, %s49
      %p58 = scmp.eq.s32.totalorder %s20, 1
      %p59 = por %p57, %p58
      %p60 = scmp.ne.s32.totalorder %s49, %s50
      %p61 = scmp.eq.s32.totalorder %s20, 0
      %p62 = por %p60, %p61
      %p63 = scmp.ne.s32.totalorder %s49, %s50
      %p64 = scmp.eq.s32.totalorder %s21, 1
      %p65 = por %p63, %p64
      %p67 = scmp.ne.s32.totalorder %s50, %s66
      %p68 = scmp.eq.s32.totalorder %s21, 0
      %p69 = por %p67, %p68
      %s70 = ssub.s32 %s22, %s41
      %s71 = ssub.s32 %s24, %s33
      %s72 = sor.u32 %s70, %s71
      %p73 = scmp.eq.s32.totalorder %s72, 0
      %s75 = sadd.s32 %s74, 1
      %s76 = scalar_select %p73, %s74, %s75
      %p79 = pneg %p73
      %p80 = scmp.eq.s32.totalorder %s15, 1
      %p81 = por %p79, %p80
      %p82 = scmp.ne.s32.totalorder %s74, %s77
      %p83 = scmp.eq.s32.totalorder %s15, 0
      %p84 = por %p82, %p83
      %p85 = scmp.ne.s32.totalorder %s74, %s77
      %p86 = scmp.eq.s32.totalorder %s20, 1
      %p87 = por %p85, %p86
      %p88 = scmp.ne.s32.totalorder %s77, %s78
      %p89 = scmp.eq.s32.totalorder %s20, 0
      %p90 = por %p88, %p89
      %p91 = scmp.ne.s32.totalorder %s77, %s78
      %p92 = scmp.eq.s32.totalorder %s21, 1
      %p93 = por %p91, %p92
      %p95 = scmp.ne.s32.totalorder %s78, %s94
      %p96 = scmp.eq.s32.totalorder %s21, 0
      %p97 = por %p95, %p96
      %s99 = sadd.s32 %s98, 1
      %p102 = scmp.eq.s32.totalorder %s15, 1
      %p103 = scmp.ne.s32.totalorder %s98, %s100
      %p104 = scmp.eq.s32.totalorder %s15, 0
      %p105 = por %p103, %p104
      %p106 = scmp.ne.s32.totalorder %s98, %s100
      %p107 = scmp.eq.s32.totalorder %s20, 1
      %p108 = por %p106, %p107
      %p109 = scmp.ne.s32.totalorder %s100, %s101
      %p110 = scmp.eq.s32.totalorder %s20, 0
      %p111 = por %p109, %p110
      %p112 = scmp.ne.s32.totalorder %s100, %s101
      %p113 = scmp.eq.s32.totalorder %s21, 1
      %p114 = por %p112, %p113
      %p116 = scmp.ne.s32.totalorder %s101, %s115
      %p117 = scmp.eq.s32.totalorder %s21, 0
      %p118 = por %p116, %p117
      %s120 = sadd.s32 %s119, 1
      %p123 = scmp.eq.s32.totalorder %s15, 1
      %p124 = scmp.ne.s32.totalorder %s119, %s121
      %p125 = scmp.eq.s32.totalorder %s15, 0
      %p126 = por %p124, %p125
      %p127 = scmp.ne.s32.totalorder %s119, %s121
      %p128 = scmp.eq.s32.totalorder %s20, 1
      %p129 = por %p127, %p128
      %p130 = scmp.ne.s32.totalorder %s121, %s122
      %p131 = scmp.eq.s32.totalorder %s20, 0
      %p132 = por %p130, %p131
      %p133 = scmp.ne.s32.totalorder %s121, %s122
      %p134 = scmp.eq.s32.totalorder %s21, 1
      %p135 = por %p133, %p134
      %p137 = scmp.ne.s32.totalorder %s122, %s136
      %p138 = scmp.eq.s32.totalorder %s21, 0
      %p139 = por %p137, %p138
      %s141 = sadd.s32 %s140, 1
      %p144 = scmp.eq.s32.totalorder %s15, 1
      %p145 = scmp.ne.s32.totalorder %s140, %s142
      %p146 = scmp.eq.s32.totalorder %s15, 0
      %p147 = por %p145, %p146
      %p148 = scmp.ne.s32.totalorder %s140, %s142
      %p149 = scmp.eq.s32.totalorder %s20, 1
      %p150 = por %p148, %p149
      %p151 = scmp.ne.s32.totalorder %s142, %s143
      %p152 = scmp.eq.s32.totalorder %s20, 0
      %p153 = por %p151, %p152
      %p154 = scmp.ne.s32.totalorder %s142, %s143
      %p155 = scmp.eq.s32.totalorder %s21, 1
      %p156 = por %p154, %p155
      %p158 = scmp.ne.s32.totalorder %s143, %s157
      %p159 = scmp.eq.s32.totalorder %s21, 0
      %p160 = por %p158, %p159
      %s162 = sadd.s32 %s161, 1
      %p165 = scmp.eq.s32.totalorder %s15, 1
      %p166 = scmp.ne.s32.totalorder %s161, %s163
      %p167 = scmp.eq.s32.totalorder %s15, 0
      %p168 = por %p166, %p167
      %p169 = scmp.ne.s32.totalorder %s161, %s163
      %p170 = scmp.eq.s32.totalorder %s20, 1
      %p171 = por %p169, %p170
      %p172 = scmp.ne.s32.totalorder %s163, %s164
      %p173 = scmp.eq.s32.totalorder %s20, 0
      %p174 = por %p172, %p173
      %p175 = scmp.ne.s32.totalorder %s163, %s164
      %p176 = scmp.eq.s32.totalorder %s21, 1
      %p177 = por %p175, %p176
      %p179 = scmp.ne.s32.totalorder %s164, %s178
      %p180 = scmp.eq.s32.totalorder %s21, 0
      %p181 = por %p179, %p180
      %s182 = ssub.s32 %s22, %s41
      %s183 = ssub.s32 %s23, %s37
      %s184 = sor.u32 %s182, %s183
      %p185 = scmp.eq.s32.totalorder %s184, 0
      %s187 = sadd.s32 %s186, 1
      %s188 = scalar_select %p185, %s186, %s187
      %p191 = pneg %p185
      %p192 = scmp.eq.s32.totalorder %s15, 1
      %p193 = por %p191, %p192
      %p194 = scmp.ne.s32.totalorder %s186, %s189
      %p195 = scmp.eq.s32.totalorder %s15, 0
      %p196 = por %p194, %p195
      %p197 = scmp.ne.s32.totalorder %s186, %s189
      %p198 = scmp.eq.s32.totalorder %s20, 1
      %p199 = por %p197, %p198
      %p200 = scmp.ne.s32.totalorder %s189, %s190
      %p201 = scmp.eq.s32.totalorder %s20, 0
      %p202 = por %p200, %p201
      %p203 = scmp.ne.s32.totalorder %s189, %s190
      %p204 = scmp.eq.s32.totalorder %s21, 1
      %p205 = por %p203, %p204
      %p207 = scmp.ne.s32.totalorder %s190, %s206
      %p208 = scmp.eq.s32.totalorder %s21, 0
      %p209 = por %p207, %p208
      %p210 = scmp.le.s32.totalorder 1, %s15
      %p211 = scmp.lt.s32.totalorder %s15, 3
      %p212 = pnand %p210, %p211
      %p213 = pneg %p212
      // Predicated region
      $region9: #{tpu_custom_call.1} parent=5 // pred_check
        _
      $region10: #{tpu_custom_call.1} parent=5 // pred_check_branch
        %215 = sbr.rel (%p212) target = $region12
      $region11: #{tpu_custom_call.1} parent=5 // pred_region
        %s216 = ssub.s32 %s15, 1
        // Predicated region
        $region13: #{tpu_custom_call.1} parent=11 // pred_check
          %p217 = pneg %p111
        $region14: #{tpu_custom_call.1} parent=11 // pred_check_branch
          %219 = sbr.rel (%p217) target = $region16
        $region15: #{tpu_custom_call.1} parent=11 // pred_region
          _
        $region16: #{tpu_custom_call.1} parent=11 // pred_fallthru
          _
        // Predicated region
        $region17: #{tpu_custom_call.1} parent=11 // pred_check
          %p220 = pneg %p132
        $region18: #{tpu_custom_call.1} parent=11 // pred_check_branch
          %222 = sbr.rel (%p220) target = $region20
        $region19: #{tpu_custom_call.1} parent=11 // pred_region
          _
        $region20: #{tpu_custom_call.1} parent=11 // pred_fallthru
          _
        // Predicated region
        $region21: #{tpu_custom_call.1} parent=11 // pred_check
          %p223 = pneg %p153
        $region22: #{tpu_custom_call.1} parent=11 // pred_check_branch
          %225 = sbr.rel (%p223) target = $region24
        $region23: #{tpu_custom_call.1} parent=11 // pred_region
          _
        $region24: #{tpu_custom_call.1} parent=11 // pred_fallthru
          _
        // Predicated region
        $region25: #{tpu_custom_call.1} parent=11 // pred_check
          %p226 = pneg %p174
        $region26: #{tpu_custom_call.1} parent=11 // pred_check_branch
          %228 = sbr.rel (%p226) target = $region28
        $region27: #{tpu_custom_call.1} parent=11 // pred_region
          _
        $region28: #{tpu_custom_call.1} parent=11 // pred_fallthru
          _
      $region12: #{tpu_custom_call.1} parent=5 // pred_fallthru
        _
      %p229 = scmp.lt.s32.totalorder %s15, 2
      // Predicated region
      $region29: #{tpu_custom_call.1} parent=5 // pred_check
        %p230 = pneg %p229
      $region30: #{tpu_custom_call.1} parent=5 // pred_check_branch
        %232 = sbr.rel (%p230) target = $region32
      $region31: #{tpu_custom_call.1} parent=5 // pred_region
        // Predicated region
        $region33: #{tpu_custom_call.1} parent=31 // pred_check
          %p233 = pneg %p56
        $region34: #{tpu_custom_call.1} parent=31 // pred_check_branch
          %235 = sbr.rel (%p233) target = $region36
        $region35: #{tpu_custom_call.1} parent=31 // pred_region
          %p236 = scmp.lt.s32.totalorder %s22, 1
          %s237 = scalar_select %p236, %s22, 1
          %p238 = scmp.lt.s32.totalorder %s23, 0
          %s239 = scalar_select %p238, %s23, 0
          %s240 = sadd.s32 %s239, %s237
          %s241 = smul.addr %s240, 8
          %s242 = scalar_lea.vmem %s0, %s241
        $region36: #{tpu_custom_call.1} parent=31 // pred_fallthru
          _
        // Predicated region
        $region37: #{tpu_custom_call.1} parent=31 // pred_check
          %p243 = pneg %p84
        $region38: #{tpu_custom_call.1} parent=31 // pred_check_branch
          %245 = sbr.rel (%p243) target = $region40
        $region39: #{tpu_custom_call.1} parent=31 // pred_region
          %p246 = scmp.lt.s32.totalorder %s22, 1
          %s247 = scalar_select %p246, %s22, 1
          %p248 = scmp.lt.s32.totalorder %s24, 0
          %s249 = scalar_select %p248, %s24, 0
          %s250 = sadd.s32 %s249, %s247
          %s251 = smul.addr %s250, 8
          %s252 = scalar_lea.vmem %s1, %s251
        $region40: #{tpu_custom_call.1} parent=31 // pred_fallthru
          _
      $region32: #{tpu_custom_call.1} parent=5 // pred_fallthru
        _
      %p253 = scmp.le.s32.totalorder 1, %s15
      %p254 = scmp.lt.s32.totalorder %s15, 3
      %p255 = pnand %p253, %p254
      %p256 = pneg %p255
      // Predicated region
      $region41: #{tpu_custom_call.1} parent=5 // pred_check
        _
      $region42: #{tpu_custom_call.1} parent=5 // pred_check_branch
        %258 = sbr.rel (%p255) target = $region44
      $region43: #{tpu_custom_call.1} parent=5 // pred_region
        %s259 = ssub.s32 %s15, 1
        %p260 = scmp.lt.s32.totalorder %s25, 1
        %s261 = scalar_select %p260, %s25, 1
        %p262 = scmp.lt.s32.totalorder %s26, 0
        %s263 = scalar_select %p262, %s26, 0
        %s264 = sadd.s32 %s263, %s261
        %s265 = smul.addr %s264, 8
        %s266 = scalar_lea.vmem %s0, %s265
        %p267 = pneg %p62
        %p268 = pneg %p59
        %p269 = scmp.lt.s32.totalorder %s25, 1
        %s270 = scalar_select %p269, %s25, 1
        %p271 = scmp.lt.s32.totalorder %s27, 0
        %s272 = scalar_select %p271, %s27, 0
        %s273 = sadd.s32 %s272, %s270
        %s274 = smul.addr %s273, 8
        %s275 = scalar_lea.vmem %s1, %s274
        %p276 = pneg %p90
        %p277 = pneg %p87
        %p278 = pneg %p111
        %p279 = pneg %p108
        %p280 = pneg %p132
        %p281 = pneg %p129
        %p282 = pneg %p153
        %p283 = pneg %p150
        %p284 = pneg %p174
        %p285 = pneg %p171
        %p286 = pneg %p202
        %p287 = pneg %p199
        %s288 = sand.u32 %s189, 1
        %s289 = scalar_lea.sflag [#allocation7], %s288
        %s290 = sand.u32 %s189, 1
        %s291 = smul.addr %s290, 8
        %s292 = scalar_lea.vmem [#allocation6], %s291
        %p293 = scmp.lt.s32.totalorder %s25, 1
        %s294 = scalar_select %p293, %s25, 1
        %p295 = scmp.lt.s32.totalorder %s26, 0
        %s296 = scalar_select %p295, %s26, 0
        %s297 = sadd.s32 %s296, %s294
        %s298 = smul.addr %s297, 8
        %s299 = scalar_lea.vmem %s0, %s298
        %p300 = scmp.lt.s32.totalorder %s25, 1
        %s301 = scalar_select %p300, %s25, 1
        %p302 = scmp.lt.s32.totalorder %s27, 0
        %s303 = scalar_select %p302, %s27, 0
        %s304 = sadd.s32 %s303, %s301
        %s305 = smul.addr %s304, 8
        %s306 = scalar_lea.vmem %s1, %s305
        %p307 = scmp.eq.s32.totalorder %s27, 0
        // Predicated region
        $region45: #{tpu_custom_call.1} parent=43 // pred_check
          %p308 = pneg %p307
        $region46: #{tpu_custom_call.1} parent=43 // pred_check_branch
          %310 = sbr.rel (%p308) target = $region48
        $region47: #{tpu_custom_call.1} parent=43 // pred_region
          %v311 = vld [vmem:[%s299] sm:$0xff]
          %v312 = vld [vmem:[%s2] sm:$0xff]
          %v313 = vld [vmem:[%s2 + $0x8] sm:$0xff]
          %v314 = vld [vmem:[%s2 + $0x10] sm:$0xff]
          %v315 = vld [vmem:[%s2 + $0x18] sm:$0xff]
          %vm316 = vcmask 261120
          %v318 = vsel %vm316, %v311, 0
          %320 = vmatprep.subr.mxu0 0.0
          %321 = vmatpush1.msra.mxu0 %v312
          %322 = vmatprep.subr.mxu0 0.0
          %323 = vmatpush1.msra.mxu0 %v313
          %324 = vmatprep.subr.mxu0 0.0
          %325 = vmatpush1.msra.mxu0 %v314
          %326 = vmatprep.subr.mxu0 0.0
          %327 = vmatpush1.msra.mxu0 %v315
          %328 = vmatprep.subr.mxu0 0.0
          %329 = vmatpush1.msra.mxu0 0.0
          %330 = vmatprep.subr.mxu0 0.0
          %331 = vmatpush1.msra.mxu0 0.0
          %332 = vmatprep.subr.mxu0 0.0
          %333 = vmatpush1.msra.mxu0 0.0
          %334 = vmatprep.subr.mxu0 0.0
          %335 = vmatpush1.msra.mxu0 0.0
          %336 = vmatprep.subr.mxu0 0.0
          %337 = vmatpush1.msra.mxu0 0.0
          %338 = vmatprep.subr.mxu0 0.0
          %339 = vmatpush1.msra.mxu0 0.0
          %340 = vmatprep.subr.mxu0 0.0
          %341 = vmatpush1.msra.mxu0 0.0
          %342 = vmatprep.subr.mxu0 0.0
          %343 = vmatpush1.msra.mxu0 0.0
          %344 = vmatprep.subr.mxu0 0.0
          %345 = vmatpush1.msra.mxu0 0.0
          %346 = vmatprep.subr.mxu0 0.0
          %347 = vmatpush1.msra.mxu0 0.0
          %348 = vmatprep.subr.mxu0 0.0
          %349 = vmatpush1.msra.mxu0 0.0
          %350 = vmatprep.subr.mxu0 0.0
          %351 = vmatpush1.msra.mxu0 0.0
          %352 = vmatprep.subr.mxu0 0.0
          %353 = vmatpush1.msra.mxu0 0.0
          %354 = vmatprep.subr.mxu0 0.0
          %355 = vmatpush1.msra.mxu0 0.0
          %356 = vmatprep.subr.mxu0 0.0
          %357 = vmatpush1.msra.mxu0 0.0
          %358 = vmatprep.subr.mxu0 0.0
          %359 = vmatpush1.msra.mxu0 0.0
          %360 = vmatprep.subr.mxu0 0.0
          %361 = vmatpush1.msra.mxu0 0.0
          %362 = vmatprep.subr.mxu0 0.0
          %363 = vmatpush1.msra.mxu0 0.0
          %364 = vmatprep.subr.mxu0 0.0
          %365 = vmatpush1.msra.mxu0 0.0
          %366 = vmatprep.subr.mxu0 0.0
          %367 = vmatpush1.msra.mxu0 0.0
          %368 = vmatprep.subr.mxu0 0.0
          %369 = vmatpush1.msra.mxu0 0.0
          %370 = vmatprep.subr.mxu0 0.0
          %371 = vmatpush1.msra.mxu0 0.0
          %372 = vmatprep.subr.mxu0 0.0
          %373 = vmatpush1.msra.mxu0 0.0
          %374 = vmatprep.subr.mxu0 0.0
          %375 = vmatpush1.msra.mxu0 0.0
          %376 = vmatprep.subr.mxu0 0.0
          %377 = vmatpush1.msra.mxu0 0.0
          %378 = vmatprep.subr.mxu0 0.0
          %379 = vmatpush1.msra.mxu0 0.0
          %380 = vmatprep.subr.mxu0 0.0
          %381 = vmatpush1.msra.mxu0 0.0
          %382 = vmatprep.subr.mxu0 0.0
          %383 = vmatpush1.msra.mxu0 0.0
          %384 = vmatprep.mubr.f32.mxu0 0.0
          %385 = vmatmul.mubr.f32.gmra.mrb[0].mxu0 %v318
          %v386 = vpop.f32.mrb[0].mxu0
          %v387 = vadd.f32 0.0, %v386
          %v388 = vpop.f32.mrb[0].mxu0
          %389 = vdwg.mxu0
          %390 = vst [vmem:[#allocation2] sm:$0xff] %v387
          %vm391 = vcmask 7168
          %392 = vst.msk [vmem:[#allocation3] sm:$0xff] %vm391, -inf
          %393 = vst.msk [vmem:[#allocation3 + $0x8] sm:$0xff] %vm391, -inf
          %394 = vst.msk [vmem:[#allocation3 + $0x10] sm:$0xff] %vm391, -inf
          %395 = vst.msk [vmem:[#allocation3 + $0x18] sm:$0xff] %vm391, -inf
          %396 = vst.msk [vmem:[#allocation4] sm:$0xff] %vm391, 0.0
          %397 = vst.msk [vmem:[#allocation4 + $0x8] sm:$0xff] %vm391, 0.0
          %398 = vst.msk [vmem:[#allocation4 + $0x10] sm:$0xff] %vm391, 0.0
          %399 = vst.msk [vmem:[#allocation4 + $0x18] sm:$0xff] %vm391, 0.0
          %400 = vst [vmem:[#allocation5] sm:$0xff] 0.0
        $region48: #{tpu_custom_call.1} parent=43 // pred_fallthru
          _
        %v401 = vld [vmem:[%s306] sm:$0xff]
        %v402 = vld [vmem:[%s3] sm:$0xff]
        %v403 = vld [vmem:[%s3 + $0x8] sm:$0xff]
        %v404 = vld [vmem:[%s3 + $0x10] sm:$0xff]
        %v405 = vld [vmem:[%s3 + $0x18] sm:$0xff]
        %v406 = vld [vmem:[%s3 + $0x20] sm:$0xff]
        %v407 = vld [vmem:[%s3 + $0x28] sm:$0xff]
        %v408 = vld [vmem:[%s3 + $0x30] sm:$0xff]
        %v409 = vld [vmem:[%s3 + $0x38] sm:$0xff]
        %vm410 = vcmask 261120
        %v412 = vsel %vm410, %v401, 0
        %414 = vmatprep.subr.mxu0 %v403
        %415 = vmatpush1.msra.mxu0 %v402
        %416 = vmatprep.subr.mxu0 %v405
        %417 = vmatpush1.msra.mxu0 %v404
        %418 = vmatprep.subr.mxu0 %v407
        %419 = vmatpush1.msra.mxu0 %v406
        %420 = vmatprep.subr.mxu0 %v409
        %421 = vmatpush1.msra.mxu0 %v408
        %422 = vmatprep.subr.mxu0 0.0
        %423 = vmatpush1.msra.mxu0 0.0
        %424 = vmatprep.subr.mxu0 0.0
        %425 = vmatpush1.msra.mxu0 0.0
        %426 = vmatprep.subr.mxu0 0.0
        %427 = vmatpush1.msra.mxu0 0.0
        %428 = vmatprep.subr.mxu0 0.0
        %429 = vmatpush1.msra.mxu0 0.0
        %430 = vmatprep.subr.mxu0 0.0
        %431 = vmatpush1.msra.mxu0 0.0
        %432 = vmatprep.subr.mxu0 0.0
        %433 = vmatpush1.msra.mxu0 0.0
        %434 = vmatprep.subr.mxu0 0.0
        %435 = vmatpush1.msra.mxu0 0.0
        %436 = vmatprep.subr.mxu0 0.0
        %437 = vmatpush1.msra.mxu0 0.0
        %438 = vmatprep.subr.mxu0 0.0
        %439 = vmatpush1.msra.mxu0 0.0
        %440 = vmatprep.subr.mxu0 0.0
        %441 = vmatpush1.msra.mxu0 0.0
        %442 = vmatprep.subr.mxu0 0.0
        %443 = vmatpush1.msra.mxu0 0.0
        %444 = vmatprep.subr.mxu0 0.0
        %445 = vmatpush1.msra.mxu0 0.0
        %446 = vmatprep.subr.mxu0 0.0
        %447 = vmatpush1.msra.mxu0 0.0
        %448 = vmatprep.subr.mxu0 0.0
        %449 = vmatpush1.msra.mxu0 0.0
        %450 = vmatprep.subr.mxu0 0.0
        %451 = vmatpush1.msra.mxu0 0.0
        %452 = vmatprep.subr.mxu0 0.0
        %453 = vmatpush1.msra.mxu0 0.0
        %454 = vmatprep.subr.mxu0 0.0
        %455 = vmatpush1.msra.mxu0 0.0
        %456 = vmatprep.subr.mxu0 0.0
        %457 = vmatpush1.msra.mxu0 0.0
        %458 = vmatprep.subr.mxu0 0.0
        %459 = vmatpush1.msra.mxu0 0.0
        %460 = vmatprep.subr.mxu0 0.0
        %461 = vmatpush1.msra.mxu0 0.0
        %462 = vmatprep.subr.mxu0 0.0
        %463 = vmatpush1.msra.mxu0 0.0
        %464 = vmatprep.subr.mxu0 0.0
        %465 = vmatpush1.msra.mxu0 0.0
        %466 = vmatprep.subr.mxu0 0.0
        %467 = vmatpush1.msra.mxu0 0.0
        %468 = vmatprep.subr.mxu0 0.0
        %469 = vmatpush1.msra.mxu0 0.0
        %470 = vmatprep.subr.mxu0 0.0
        %471 = vmatpush1.msra.mxu0 0.0
        %472 = vmatprep.subr.mxu0 0.0
        %473 = vmatpush1.msra.mxu0 0.0
        %474 = vmatprep.subr.mxu0 0.0
        %475 = vmatpush1.msra.mxu0 0.0
        %476 = vmatprep.subr.mxu0 0.0
        %477 = vmatpush1.msra.mxu0 0.0
        %478 = vmatprep.mubr.f32.mxu0 0.0
        %479 = vmatmul.mubr.f32.gmra.mrb[0].mxu0 %v412
        %v480 = vpop.f32.mrb[0].mxu0
        %v481 = vadd.f32 0.0, %v480
        %v482 = vpop.f32.mrb[0].mxu0
        %v483 = vadd.f32 0.0, %v482
        %484 = vdwg.mxu0
        %v485 = vld [vmem:[#allocation2] sm:$0xff]
        %v487 = vsel %vm410, %v485, 0
        %v490 = vsel %vm410, %v481, 0
        %492 = vmatprep.subr.mxu0 0.0
        %493 = vmatpush1.xpose.msra.mxu0 %v490
        %494 = vmatprep.subr.mxu0 0.0
        %495 = vmatpush1.xpose.msra.mxu0 0.0
        %496 = vmatprep.subr.mxu0 0.0
        %497 = vmatpush1.xpose.msra.mxu0 0.0
        %498 = vmatprep.subr.mxu0 0.0
        %499 = vmatpush1.xpose.msra.mxu0 0.0
        %500 = vmatprep.subr.mxu0 0.0
        %501 = vmatpush1.xpose.msra.mxu0 0.0
        %502 = vmatprep.subr.mxu0 0.0
        %503 = vmatpush1.xpose.msra.mxu0 0.0
        %504 = vmatprep.subr.mxu0 0.0
        %505 = vmatpush1.xpose.msra.mxu0 0.0
        %506 = vmatprep.subr.mxu0 0.0
        %507 = vmatpush1.xpose.msra.mxu0 0.0
        %508 = vmatprep.subr.mxu0 0.0
        %509 = vmatpush1.xpose.msra.mxu0 0.0
        %510 = vmatprep.subr.mxu0 0.0
        %511 = vmatpush1.xpose.msra.mxu0 0.0
        %512 = vmatprep.subr.mxu0 0.0
        %513 = vmatpush1.xpose.msra.mxu0 0.0
        %514 = vmatprep.subr.mxu0 0.0
        %515 = vmatpush1.xpose.msra.mxu0 0.0
        %516 = vmatprep.subr.mxu0 0.0
        %517 = vmatpush1.xpose.msra.mxu0 0.0
        %518 = vmatprep.subr.mxu0 0.0
        %519 = vmatpush1.xpose.msra.mxu0 0.0
        %520 = vmatprep.subr.mxu0 0.0
        %521 = vmatpush1.xpose.msra.mxu0 0.0
        %522 = vmatprep.subr.mxu0 0.0
        %523 = vmatpush1.xpose.msra.mxu0 0.0
        %524 = vmatprep.subr.mxu0 0.0
        %525 = vmatpush1.xpose.msra.mxu0 0.0
        %526 = vmatprep.subr.mxu0 0.0
        %527 = vmatpush1.xpose.msra.mxu0 0.0
        %528 = vmatprep.subr.mxu0 0.0
        %529 = vmatpush1.xpose.msra.mxu0 0.0
        %530 = vmatprep.subr.mxu0 0.0
        %531 = vmatpush1.xpose.msra.mxu0 0.0
        %532 = vmatprep.subr.mxu0 0.0
        %533 = vmatpush1.xpose.msra.mxu0 0.0
        %534 = vmatprep.subr.mxu0 0.0
        %535 = vmatpush1.xpose.msra.mxu0 0.0
        %536 = vmatprep.subr.mxu0 0.0
        %537 = vmatpush1.xpose.msra.mxu0 0.0
        %538 = vmatprep.subr.mxu0 0.0
        %539 = vmatpush1.xpose.msra.mxu0 0.0
        %540 = vmatprep.subr.mxu0 0.0
        %541 = vmatpush1.xpose.msra.mxu0 0.0
        %542 = vmatprep.subr.mxu0 0.0
        %543 = vmatpush1.xpose.msra.mxu0 0.0
        %544 = vmatprep.subr.mxu0 0.0
        %545 = vmatpush1.xpose.msra.mxu0 0.0
        %546 = vmatprep.subr.mxu0 0.0
        %547 = vmatpush1.xpose.msra.mxu0 0.0
        %548 = vmatprep.subr.mxu0 0.0
        %549 = vmatpush1.xpose.msra.mxu0 0.0
        %550 = vmatprep.subr.mxu0 0.0
        %551 = vmatpush1.xpose.msra.mxu0 0.0
        %552 = vmatprep.subr.mxu0 0.0
        %553 = vmatpush1.xpose.msra.mxu0 0.0
        %554 = vmatprep.subr.mxu0 0.0
        %555 = vmatpush1.xpose.msra.mxu0 0.0
        %556 = vmatprep.mubr.f32.mxu0 0.0
        %557 = vmatmul.mubr.f32.gmra.mrb[0].mxu0 %v487
        %v558 = vpop.f32.mrb[0].mxu0
        %v559 = vadd.f32 0.0, %v558
        %v560 = vpop.f32.mrb[0].mxu0
        %561 = vdwg.mxu0
        %v562 = vld [vmem:[#allocation3] sm:$0xff]
        %vm563 = vcmask 64512
        %v564 = vsel %vm563, %v559, -inf
        %565 = vmax.xlane.f32.xlu0 %v564
        %v566 = vpop.xlane.xlu0 %565
        %v567 = vmax.f32 %v562, %v566
        %v568 = vsub.f32 %v562, %v567
        %v569 = vmul.f32 %v568, 1.442695
        %v570 = vpow.pop %v569
        %572 = vset.pattern.permute.xlu0 0
        %573 = vperm.xlu0 %572, %v567
        %v574 = vpop.permute.xlu0 %573
        %v576 = vsub.f32 %v559, %v574
        %v577 = vmul.f32 %v576, 1.442695
        %v578 = vpow.pop %v577
        %v579 = vld [vmem:[#allocation4] sm:$0xff]
        %v580 = vmul.f32 %v570, %v579
        %v581 = vsel %vm563, %v578, 0.0
        %582 = vadd.xlane.f32.xlu0 %v581
        %v583 = vpop.xlane.xlu0 %582
        %v584 = vadd.f32 %v580, %v583
        %vm585 = vcmask 7168
        %586 = vst.msk [vmem:[#allocation4] sm:$0xff] %vm585, %v584
        %v588 = vsel %vm563, %v578, 0
        %590 = vmatprep.subr.mxu0 0.0
        %591 = vmatpush1.msra.mxu0 %v483
        %592 = vmatprep.subr.mxu0 0.0
        %593 = vmatpush1.msra.mxu0 0.0
        %594 = vmatprep.subr.mxu0 0.0
        %595 = vmatpush1.msra.mxu0 0.0
        %596 = vmatprep.subr.mxu0 0.0
        %597 = vmatpush1.msra.mxu0 0.0
        %598 = vmatprep.subr.mxu0 0.0
        %599 = vmatpush1.msra.mxu0 0.0
        %600 = vmatprep.subr.mxu0 0.0
        %601 = vmatpush1.msra.mxu0 0.0
        %602 = vmatprep.subr.mxu0 0.0
        %603 = vmatpush1.msra.mxu0 0.0
        %604 = vmatprep.subr.mxu0 0.0
        %605 = vmatpush1.msra.mxu0 0.0
        %606 = vmatprep.subr.mxu0 0.0
        %607 = vmatpush1.msra.mxu0 0.0
        %608 = vmatprep.subr.mxu0 0.0
        %609 = vmatpush1.msra.mxu0 0.0
        %610 = vmatprep.subr.mxu0 0.0
        %611 = vmatpush1.msra.mxu0 0.0
        %612 = vmatprep.subr.mxu0 0.0
        %613 = vmatpush1.msra.mxu0 0.0
        %614 = vmatprep.subr.mxu0 0.0
        %615 = vmatpush1.msra.mxu0 0.0
        %616 = vmatprep.subr.mxu0 0.0
        %617 = vmatpush1.msra.mxu0 0.0
        %618 = vmatprep.subr.mxu0 0.0
        %619 = vmatpush1.msra.mxu0 0.0
        %620 = vmatprep.subr.mxu0 0.0
        %621 = vmatpush1.msra.mxu0 0.0
        %622 = vmatprep.subr.mxu0 0.0
        %623 = vmatpush1.msra.mxu0 0.0
        %624 = vmatprep.subr.mxu0 0.0
        %625 = vmatpush1.msra.mxu0 0.0
        %626 = vmatprep.subr.mxu0 0.0
        %627 = vmatpush1.msra.mxu0 0.0
        %628 = vmatprep.subr.mxu0 0.0
        %629 = vmatpush1.msra.mxu0 0.0
        %630 = vmatprep.subr.mxu0 0.0
        %631 = vmatpush1.msra.mxu0 0.0
        %632 = vmatprep.subr.mxu0 0.0
        %633 = vmatpush1.msra.mxu0 0.0
        %634 = vmatprep.subr.mxu0 0.0
        %635 = vmatpush1.msra.mxu0 0.0
        %636 = vmatprep.subr.mxu0 0.0
        %637 = vmatpush1.msra.mxu0 0.0
        %638 = vmatprep.subr.mxu0 0.0
        %639 = vmatpush1.msra.mxu0 0.0
        %640 = vmatprep.subr.mxu0 0.0
        %641 = vmatpush1.msra.mxu0 0.0
        %642 = vmatprep.subr.mxu0 0.0
        %643 = vmatpush1.msra.mxu0 0.0
        %644 = vmatprep.subr.mxu0 0.0
        %645 = vmatpush1.msra.mxu0 0.0
        %646 = vmatprep.subr.mxu0 0.0
        %647 = vmatpush1.msra.mxu0 0.0
        %648 = vmatprep.subr.mxu0 0.0
        %649 = vmatpush1.msra.mxu0 0.0
        %650 = vmatprep.subr.mxu0 0.0
        %651 = vmatpush1.msra.mxu0 0.0
        %652 = vmatprep.subr.mxu0 0.0
        %653 = vmatpush1.msra.mxu0 0.0
        %654 = vmatprep.mubr.f32.mxu0 0.0
        %655 = vmatmul.mubr.f32.gmra.mrb[0].mxu0 %v588
        %v656 = vpop.f32.mrb[0].mxu0
        %v657 = vadd.f32 0.0, %v656
        %v658 = vpop.f32.mrb[0].mxu0
        %659 = vdwg.mxu0
        %v660 = vld [vmem:[#allocation5] sm:$0xff]
        %662 = vset.pattern.permute.xlu0 0
        %663 = vperm.xlu0 %662, %v570
        %v664 = vpop.permute.xlu0 %663
        %v666 = vmul.f32 %v664, %v660
        %v667 = vadd.f32 %v666, %v657
        %668 = vst.msk [vmem:[#allocation5] sm:$0xff] %vm410, %v667
        %669 = vst.msk [vmem:[#allocation3] sm:$0xff] %vm585, %v567
        %v670 = vld [vmem:[#allocation2] sm:$0xff]
        %672 = vrot.lane.b32.xlu0 %v670, 96
        %v673 = vpop.permute.xlu0 %672
        %674 = vrot.lane.b32.xlu0 %v481, 96
        %v675 = vpop.permute.xlu0 %674
        %v676 = vsel %vm410, %v673, 0
        %v678 = vsel %vm410, %v675, 0
        %680 = vmatprep.subr.mxu0 0.0
        %681 = vmatpush1.xpose.msra.mxu0 %v678
        %682 = vmatprep.subr.mxu0 0.0
        %683 = vmatpush1.xpose.msra.mxu0 0.0
        %684 = vmatprep.subr.mxu0 0.0
        %685 = vmatpush1.xpose.msra.mxu0 0.0
        %686 = vmatprep.subr.mxu0 0.0
        %687 = vmatpush1.xpose.msra.mxu0 0.0
        %688 = vmatprep.subr.mxu0 0.0
        %689 = vmatpush1.xpose.msra.mxu0 0.0
        %690 = vmatprep.subr.mxu0 0.0
        %691 = vmatpush1.xpose.msra.mxu0 0.0
        %692 = vmatprep.subr.mxu0 0.0
        %693 = vmatpush1.xpose.msra.mxu0 0.0
        %694 = vmatprep.subr.mxu0 0.0
        %695 = vmatpush1.xpose.msra.mxu0 0.0
        %696 = vmatprep.subr.mxu0 0.0
        %697 = vmatpush1.xpose.msra.mxu0 0.0
        %698 = vmatprep.subr.mxu0 0.0
        %699 = vmatpush1.xpose.msra.mxu0 0.0
        %700 = vmatprep.subr.mxu0 0.0
        %701 = vmatpush1.xpose.msra.mxu0 0.0
        %702 = vmatprep.subr.mxu0 0.0
        %703 = vmatpush1.xpose.msra.mxu0 0.0
        %704 = vmatprep.subr.mxu0 0.0
        %705 = vmatpush1.xpose.msra.mxu0 0.0
        %706 = vmatprep.subr.mxu0 0.0
        %707 = vmatpush1.xpose.msra.mxu0 0.0
        %708 = vmatprep.subr.mxu0 0.0
        %709 = vmatpush1.xpose.msra.mxu0 0.0
        %710 = vmatprep.subr.mxu0 0.0
        %711 = vmatpush1.xpose.msra.mxu0 0.0
        %712 = vmatprep.subr.mxu0 0.0
        %713 = vmatpush1.xpose.msra.mxu0 0.0
        %714 = vmatprep.subr.mxu0 0.0
        %715 = vmatpush1.xpose.msra.mxu0 0.0
        %716 = vmatprep.subr.mxu0 0.0
        %717 = vmatpush1.xpose.msra.mxu0 0.0
        %718 = vmatprep.subr.mxu0 0.0
        %719 = vmatpush1.xpose.msra.mxu0 0.0
        %720 = vmatprep.subr.mxu0 0.0
        %721 = vmatpush1.xpose.msra.mxu0 0.0
        %722 = vmatprep.subr.mxu0 0.0
        %723 = vmatpush1.xpose.msra.mxu0 0.0
        %724 = vmatprep.subr.mxu0 0.0
        %725 = vmatpush1.xpose.msra.mxu0 0.0
        %726 = vmatprep.subr.mxu0 0.0
        %727 = vmatpush1.xpose.msra.mxu0 0.0
        %728 = vmatprep.subr.mxu0 0.0
        %729 = vmatpush1.xpose.msra.mxu0 0.0
        %730 = vmatprep.subr.mxu0 0.0
        %731 = vmatpush1.xpose.msra.mxu0 0.0
        %732 = vmatprep.subr.mxu0 0.0
        %733 = vmatpush1.xpose.msra.mxu0 0.0
        %734 = vmatprep.subr.mxu0 0.0
        %735 = vmatpush1.xpose.msra.mxu0 0.0
        %736 = vmatprep.subr.mxu0 0.0
        %737 = vmatpush1.xpose.msra.mxu0 0.0
        %738 = vmatprep.subr.mxu0 0.0
        %739 = vmatpush1.xpose.msra.mxu0 0.0
        %740 = vmatprep.subr.mxu0 0.0
        %741 = vmatpush1.xpose.msra.mxu0 0.0
        %742 = vmatprep.subr.mxu0 0.0
        %743 = vmatpush1.xpose.msra.mxu0 0.0
        %744 = vmatprep.mubr.f32.mxu0 0.0
        %745 = vmatmul.mubr.f32.gmra.mrb[0].mxu0 %v676
        %v746 = vpop.f32.mrb[0].mxu0
        %v747 = vadd.f32 0.0, %v746
        %v748 = vpop.f32.mrb[0].mxu0
        %749 = vdwg.mxu0
        %s750 = scalar_lea.vmem [#allocation3], 8
        %v751 = vld [vmem:[%s750] sm:$0xff]
        %v752 = vsel %vm563, %v747, -inf
        %753 = vmax.xlane.f32.xlu0 %v752
        %v754 = vpop.xlane.xlu0 %753
        %v755 = vmax.f32 %v751, %v754
        %v756 = vsub.f32 %v751, %v755
        %v757 = vmul.f32 %v756, 1.442695
        %v758 = vpow.pop %v757
        %760 = vset.pattern.permute.xlu0 0
        %761 = vperm.xlu0 %760, %v755
        %v762 = vpop.permute.xlu0 %761
        %v764 = vsub.f32 %v747, %v762
        %v765 = vmul.f32 %v764, 1.442695
        %v766 = vpow.pop %v765
        %s767 = scalar_lea.vmem [#allocation4], 8
        %v768 = vld [vmem:[%s767] sm:$0xff]
        %v769 = vmul.f32 %v758, %v768
        %v770 = vsel %vm563, %v766, 0.0
        %771 = vadd.xlane.f32.xlu0 %v770
        %v772 = vpop.xlane.xlu0 %771
        %v773 = vadd.f32 %v769, %v772
        %774 = vst.msk [vmem:[%s767] sm:$0xff] %vm585, %v773
        %776 = vrot.lane.b32.xlu0 %v483, 96
        %v777 = vpop.permute.xlu0 %776
        %v780 = vsel %vm563, %v766, 0
        %782 = vmatprep.subr.mxu0 0.0
        %783 = vmatpush1.msra.mxu0 %v777
        %784 = vmatprep.subr.mxu0 0.0
        %785 = vmatpush1.msra.mxu0 0.0
        %786 = vmatprep.subr.mxu0 0.0
        %787 = vmatpush1.msra.mxu0 0.0
        %788 = vmatprep.subr.mxu0 0.0
        %789 = vmatpush1.msra.mxu0 0.0
        %790 = vmatprep.subr.mxu0 0.0
        %791 = vmatpush1.msra.mxu0 0.0
        %792 = vmatprep.subr.mxu0 0.0
        %793 = vmatpush1.msra.mxu0 0.0
        %794 = vmatprep.subr.mxu0 0.0
        %795 = vmatpush1.msra.mxu0 0.0
        %796 = vmatprep.subr.mxu0 0.0
        %797 = vmatpush1.msra.mxu0 0.0
        %798 = vmatprep.subr.mxu0 0.0
        %799 = vmatpush1.msra.mxu0 0.0
        %800 = vmatprep.subr.mxu0 0.0
        %801 = vmatpush1.msra.mxu0 0.0
        %802 = vmatprep.subr.mxu0 0.0
        %803 = vmatpush1.msra.mxu0 0.0
        %804 = vmatprep.subr.mxu0 0.0
        %805 = vmatpush1.msra.mxu0 0.0
        %806 = vmatprep.subr.mxu0 0.0
        %807 = vmatpush1.msra.mxu0 0.0
        %808 = vmatprep.subr.mxu0 0.0
        %809 = vmatpush1.msra.mxu0 0.0
        %810 = vmatprep.subr.mxu0 0.0
        %811 = vmatpush1.msra.mxu0 0.0
        %812 = vmatprep.subr.mxu0 0.0
        %813 = vmatpush1.msra.mxu0 0.0
        %814 = vmatprep.subr.mxu0 0.0
        %815 = vmatpush1.msra.mxu0 0.0
        %816 = vmatprep.subr.mxu0 0.0
        %817 = vmatpush1.msra.mxu0 0.0
        %818 = vmatprep.subr.mxu0 0.0
        %819 = vmatpush1.msra.mxu0 0.0
        %820 = vmatprep.subr.mxu0 0.0
        %821 = vmatpush1.msra.mxu0 0.0
        %822 = vmatprep.subr.mxu0 0.0
        %823 = vmatpush1.msra.mxu0 0.0
        %824 = vmatprep.subr.mxu0 0.0
        %825 = vmatpush1.msra.mxu0 0.0
        %826 = vmatprep.subr.mxu0 0.0
        %827 = vmatpush1.msra.mxu0 0.0
        %828 = vmatprep.subr.mxu0 0.0
        %829 = vmatpush1.msra.mxu0 0.0
        %830 = vmatprep.subr.mxu0 0.0
        %831 = vmatpush1.msra.mxu0 0.0
        %832 = vmatprep.subr.mxu0 0.0
        %833 = vmatpush1.msra.mxu0 0.0
        %834 = vmatprep.subr.mxu0 0.0
        %835 = vmatpush1.msra.mxu0 0.0
        %836 = vmatprep.subr.mxu0 0.0
        %837 = vmatpush1.msra.mxu0 0.0
        %838 = vmatprep.subr.mxu0 0.0
        %839 = vmatpush1.msra.mxu0 0.0
        %840 = vmatprep.subr.mxu0 0.0
        %841 = vmatpush1.msra.mxu0 0.0
        %842 = vmatprep.subr.mxu0 0.0
        %843 = vmatpush1.msra.mxu0 0.0
        %844 = vmatprep.subr.mxu0 0.0
        %845 = vmatpush1.msra.mxu0 0.0
        %846 = vmatprep.mubr.f32.mxu0 0.0
        %847 = vmatmul.mubr.f32.gmra.mrb[0].mxu0 %v780
        %v848 = vpop.f32.mrb[0].mxu0
        %v849 = vadd.f32 0.0, %v848
        %v850 = vpop.f32.mrb[0].mxu0
        %851 = vdwg.mxu0
        %v852 = vld [vmem:[#allocation5] sm:$0xff]
        %854 = vset.pattern.permute.xlu0 0
        %855 = vperm.xlu0 %854, %v758
        %v856 = vpop.permute.xlu0 %855
        %v858 = vmul.f32 %v856, %v852
        %860 = vrot.lane.b32.xlu0 %v849, 32
        %v861 = vpop.permute.xlu0 %860
        %v863 = vadd.f32 %v858, %v861
        %vm864 = vcmask 523520
        %865 = vst.msk [vmem:[#allocation5] sm:$0xff] %vm864, %v863
        %866 = vst.msk [vmem:[%s750] sm:$0xff] %vm585, %v755
        %v867 = vld [vmem:[#allocation2] sm:$0xff]
        %869 = vrot.lane.b32.xlu0 %v867, 64
        %v870 = vpop.permute.xlu0 %869
        %871 = vrot.lane.b32.xlu0 %v481, 64
        %v872 = vpop.permute.xlu0 %871
        %v873 = vsel %vm410, %v870, 0
        %v875 = vsel %vm410, %v872, 0
        %877 = vmatprep.subr.mxu0 0.0
        %878 = vmatpush1.xpose.msra.mxu0 %v875
        %879 = vmatprep.subr.mxu0 0.0
        %880 = vmatpush1.xpose.msra.mxu0 0.0
        %881 = vmatprep.subr.mxu0 0.0
        %882 = vmatpush1.xpose.msra.mxu0 0.0
        %883 = vmatprep.subr.mxu0 0.0
        %884 = vmatpush1.xpose.msra.mxu0 0.0
        %885 = vmatprep.subr.mxu0 0.0
        %886 = vmatpush1.xpose.msra.mxu0 0.0
        %887 = vmatprep.subr.mxu0 0.0
        %888 = vmatpush1.xpose.msra.mxu0 0.0
        %889 = vmatprep.subr.mxu0 0.0
        %890 = vmatpush1.xpose.msra.mxu0 0.0
        %891 = vmatprep.subr.mxu0 0.0
        %892 = vmatpush1.xpose.msra.mxu0 0.0
        %893 = vmatprep.subr.mxu0 0.0
        %894 = vmatpush1.xpose.msra.mxu0 0.0
        %895 = vmatprep.subr.mxu0 0.0
        %896 = vmatpush1.xpose.msra.mxu0 0.0
        %897 = vmatprep.subr.mxu0 0.0
        %898 = vmatpush1.xpose.msra.mxu0 0.0
        %899 = vmatprep.subr.mxu0 0.0
        %900 = vmatpush1.xpose.msra.mxu0 0.0
        %901 = vmatprep.subr.mxu0 0.0
        %902 = vmatpush1.xpose.msra.mxu0 0.0
        %903 = vmatprep.subr.mxu0 0.0
        %904 = vmatpush1.xpose.msra.mxu0 0.0
        %905 = vmatprep.subr.mxu0 0.0
        %906 = vmatpush1.xpose.msra.mxu0 0.0
        %907 = vmatprep.subr.mxu0 0.0
        %908 = vmatpush1.xpose.msra.mxu0 0.0
        %909 = vmatprep.subr.mxu0 0.0
        %910 = vmatpush1.xpose.msra.mxu0 0.0
        %911 = vmatprep.subr.mxu0 0.0
        %912 = vmatpush1.xpose.msra.mxu0 0.0
        %913 = vmatprep.subr.mxu0 0.0
        %914 = vmatpush1.xpose.msra.mxu0 0.0
        %915 = vmatprep.subr.mxu0 0.0
        %916 = vmatpush1.xpose.msra.mxu0 0.0
        %917 = vmatprep.subr.mxu0 0.0
        %918 = vmatpush1.xpose.msra.mxu0 0.0
        %919 = vmatprep.subr.mxu0 0.0
        %920 = vmatpush1.xpose.msra.mxu0 0.0
        %921 = vmatprep.subr.mxu0 0.0
        %922 = vmatpush1.xpose.msra.mxu0 0.0
        %923 = vmatprep.subr.mxu0 0.0
        %924 = vmatpush1.xpose.msra.mxu0 0.0
        %925 = vmatprep.subr.mxu0 0.0
        %926 = vmatpush1.xpose.msra.mxu0 0.0
        %927 = vmatprep.subr.mxu0 0.0
        %928 = vmatpush1.xpose.msra.mxu0 0.0
        %929 = vmatprep.subr.mxu0 0.0
        %930 = vmatpush1.xpose.msra.mxu0 0.0
        %931 = vmatprep.subr.mxu0 0.0
        %932 = vmatpush1.xpose.msra.mxu0 0.0
        %933 = vmatprep.subr.mxu0 0.0
        %934 = vmatpush1.xpose.msra.mxu0 0.0
        %935 = vmatprep.subr.mxu0 0.0
        %936 = vmatpush1.xpose.msra.mxu0 0.0
        %937 = vmatprep.subr.mxu0 0.0
        %938 = vmatpush1.xpose.msra.mxu0 0.0
        %939 = vmatprep.subr.mxu0 0.0
        %940 = vmatpush1.xpose.msra.mxu0 0.0
        %941 = vmatprep.mubr.f32.mxu0 0.0
        %942 = vmatmul.mubr.f32.gmra.mrb[0].mxu0 %v873
        %v943 = vpop.f32.mrb[0].mxu0
        %v944 = vadd.f32 0.0, %v943
        %v945 = vpop.f32.mrb[0].mxu0
        %946 = vdwg.mxu0
        %s947 = scalar_lea.vmem [#allocation3], 16
        %v948 = vld [vmem:[%s947] sm:$0xff]
        %v949 = vsel %vm563, %v944, -inf
        %950 = vmax.xlane.f32.xlu0 %v949
        %v951 = vpop.xlane.xlu0 %950
        %v952 = vmax.f32 %v948, %v951
        %v953 = vsub.f32 %v948, %v952
        %v954 = vmul.f32 %v953, 1.442695
        %v955 = vpow.pop %v954
        %957 = vset.pattern.permute.xlu0 0
        %958 = vperm.xlu0 %957, %v952
        %v959 = vpop.permute.xlu0 %958
        %v961 = vsub.f32 %v944, %v959
        %v962 = vmul.f32 %v961, 1.442695
        %v963 = vpow.pop %v962
        %s964 = scalar_lea.vmem [#allocation4], 16
        %v965 = vld [vmem:[%s964] sm:$0xff]
        %v966 = vmul.f32 %v955, %v965
        %v967 = vsel %vm563, %v963, 0.0
        %968 = vadd.xlane.f32.xlu0 %v967
        %v969 = vpop.xlane.xlu0 %968
        %v970 = vadd.f32 %v966, %v969
        %971 = vst.msk [vmem:[%s964] sm:$0xff] %vm585, %v970
        %972 = vrot.lane.b32.xlu0 %v483, 64
        %v973 = vpop.permute.xlu0 %972
        %v976 = vsel %vm563, %v963, 0
        %978 = vmatprep.subr.mxu0 0.0
        %979 = vmatpush1.msra.mxu0 %v973
        %980 = vmatprep.subr.mxu0 0.0
        %981 = vmatpush1.msra.mxu0 0.0
        %982 = vmatprep.subr.mxu0 0.0
        %983 = vmatpush1.msra.mxu0 0.0
        %984 = vmatprep.subr.mxu0 0.0
        %985 = vmatpush1.msra.mxu0 0.0
        %986 = vmatprep.subr.mxu0 0.0
        %987 = vmatpush1.msra.mxu0 0.0
        %988 = vmatprep.subr.mxu0 0.0
        %989 = vmatpush1.msra.mxu0 0.0
        %990 = vmatprep.subr.mxu0 0.0
        %991 = vmatpush1.msra.mxu0 0.0
        %992 = vmatprep.subr.mxu0 0.0
        %993 = vmatpush1.msra.mxu0 0.0
        %994 = vmatprep.subr.mxu0 0.0
        %995 = vmatpush1.msra.mxu0 0.0
        %996 = vmatprep.subr.mxu0 0.0
        %997 = vmatpush1.msra.mxu0 0.0
        %998 = vmatprep.subr.mxu0 0.0
        %999 = vmatpush1.msra.mxu0 0.0
        %1000 = vmatprep.subr.mxu0 0.0
        %1001 = vmatpush1.msra.mxu0 0.0
        %1002 = vmatprep.subr.mxu0 0.0
        %1003 = vmatpush1.msra.mxu0 0.0
        %1004 = vmatprep.subr.mxu0 0.0
        %1005 = vmatpush1.msra.mxu0 0.0
        %1006 = vmatprep.subr.mxu0 0.0
        %1007 = vmatpush1.msra.mxu0 0.0
        %1008 = vmatprep.subr.mxu0 0.0
        %1009 = vmatpush1.msra.mxu0 0.0
        %1010 = vmatprep.subr.mxu0 0.0
        %1011 = vmatpush1.msra.mxu0 0.0
        %1012 = vmatprep.subr.mxu0 0.0
        %1013 = vmatpush1.msra.mxu0 0.0
        %1014 = vmatprep.subr.mxu0 0.0
        %1015 = vmatpush1.msra.mxu0 0.0
        %1016 = vmatprep.subr.mxu0 0.0
        %1017 = vmatpush1.msra.mxu0 0.0
        %1018 = vmatprep.subr.mxu0 0.0
        %1019 = vmatpush1.msra.mxu0 0.0
        %1020 = vmatprep.subr.mxu0 0.0
        %1021 = vmatpush1.msra.mxu0 0.0
        %1022 = vmatprep.subr.mxu0 0.0
        %1023 = vmatpush1.msra.mxu0 0.0
        %1024 = vmatprep.subr.mxu0 0.0
        %1025 = vmatpush1.msra.mxu0 0.0
        %1026 = vmatprep.subr.mxu0 0.0
        %1027 = vmatpush1.msra.mxu0 0.0
        %1028 = vmatprep.subr.mxu0 0.0
        %1029 = vmatpush1.msra.mxu0 0.0
        %1030 = vmatprep.subr.mxu0 0.0
        %1031 = vmatpush1.msra.mxu0 0.0
        %1032 = vmatprep.subr.mxu0 0.0
        %1033 = vmatpush1.msra.mxu0 0.0
        %1034 = vmatprep.subr.mxu0 0.0
        %1035 = vmatpush1.msra.mxu0 0.0
        %1036 = vmatprep.subr.mxu0 0.0
        %1037 = vmatpush1.msra.mxu0 0.0
        %1038 = vmatprep.subr.mxu0 0.0
        %1039 = vmatpush1.msra.mxu0 0.0
        %1040 = vmatprep.subr.mxu0 0.0
        %1041 = vmatpush1.msra.mxu0 0.0
        %1042 = vmatprep.mubr.f32.mxu0 0.0
        %1043 = vmatmul.mubr.f32.gmra.mrb[0].mxu0 %v976
        %v1044 = vpop.f32.mrb[0].mxu0
        %v1045 = vadd.f32 0.0, %v1044
        %v1046 = vpop.f32.mrb[0].mxu0
        %1047 = vdwg.mxu0
        %v1048 = vld [vmem:[#allocation5] sm:$0xff]
        %1050 = vset.pattern.permute.xlu0 0
        %1051 = vperm.xlu0 %1050, %v955
        %v1052 = vpop.permute.xlu0 %1051
        %v1054 = vmul.f32 %v1052, %v1048
        %1056 = vrot.lane.b32.xlu0 %v1045, 64
        %v1057 = vpop.permute.xlu0 %1056
        %v1059 = vadd.f32 %v1054, %v1057
        %vm1060 = vcmask 785920
        %1061 = vst.msk [vmem:[#allocation5] sm:$0xff] %vm1060, %v1059
        %1062 = vst.msk [vmem:[%s947] sm:$0xff] %vm585, %v952
        %v1063 = vld [vmem:[#allocation2] sm:$0xff]
        %1065 = vrot.lane.b32.xlu0 %v1063, 32
        %v1066 = vpop.permute.xlu0 %1065
        %1067 = vrot.lane.b32.xlu0 %v481, 32
        %v1068 = vpop.permute.xlu0 %1067
        %v1069 = vsel %vm410, %v1066, 0
        %v1071 = vsel %vm410, %v1068, 0
        %1073 = vmatprep.subr.mxu0 0.0
        %1074 = vmatpush1.xpose.msra.mxu0 %v1071
        %1075 = vmatprep.subr.mxu0 0.0
        %1076 = vmatpush1.xpose.msra.mxu0 0.0
        %1077 = vmatprep.subr.mxu0 0.0
        %1078 = vmatpush1.xpose.msra.mxu0 0.0
        %1079 = vmatprep.subr.mxu0 0.0
        %1080 = vmatpush1.xpose.msra.mxu0 0.0
        %1081 = vmatprep.subr.mxu0 0.0
        %1082 = vmatpush1.xpose.msra.mxu0 0.0
        %1083 = vmatprep.subr.mxu0 0.0
        %1084 = vmatpush1.xpose.msra.mxu0 0.0
        %1085 = vmatprep.subr.mxu0 0.0
        %1086 = vmatpush1.xpose.msra.mxu0 0.0
        %1087 = vmatprep.subr.mxu0 0.0
        %1088 = vmatpush1.xpose.msra.mxu0 0.0
        %1089 = vmatprep.subr.mxu0 0.0
        %1090 = vmatpush1.xpose.msra.mxu0 0.0
        %1091 = vmatprep.subr.mxu0 0.0
        %1092 = vmatpush1.xpose.msra.mxu0 0.0
        %1093 = vmatprep.subr.mxu0 0.0
        %1094 = vmatpush1.xpose.msra.mxu0 0.0
        %1095 = vmatprep.subr.mxu0 0.0
        %1096 = vmatpush1.xpose.msra.mxu0 0.0
        %1097 = vmatprep.subr.mxu0 0.0
        %1098 = vmatpush1.xpose.msra.mxu0 0.0
        %1099 = vmatprep.subr.mxu0 0.0
        %1100 = vmatpush1.xpose.msra.mxu0 0.0
        %1101 = vmatprep.subr.mxu0 0.0
        %1102 = vmatpush1.xpose.msra.mxu0 0.0
        %1103 = vmatprep.subr.mxu0 0.0
        %1104 = vmatpush1.xpose.msra.mxu0 0.0
        %1105 = vmatprep.subr.mxu0 0.0
        %1106 = vmatpush1.xpose.msra.mxu0 0.0
        %1107 = vmatprep.subr.mxu0 0.0
        %1108 = vmatpush1.xpose.msra.mxu0 0.0
        %1109 = vmatprep.subr.mxu0 0.0
        %1110 = vmatpush1.xpose.msra.mxu0 0.0
        %1111 = vmatprep.subr.mxu0 0.0
        %1112 = vmatpush1.xpose.msra.mxu0 0.0
        %1113 = vmatprep.subr.mxu0 0.0
        %1114 = vmatpush1.xpose.msra.mxu0 0.0
        %1115 = vmatprep.subr.mxu0 0.0
        %1116 = vmatpush1.xpose.msra.mxu0 0.0
        %1117 = vmatprep.subr.mxu0 0.0
        %1118 = vmatpush1.xpose.msra.mxu0 0.0
        %1119 = vmatprep.subr.mxu0 0.0
        %1120 = vmatpush1.xpose.msra.mxu0 0.0
        %1121 = vmatprep.subr.mxu0 0.0
        %1122 = vmatpush1.xpose.msra.mxu0 0.0
        %1123 = vmatprep.subr.mxu0 0.0
        %1124 = vmatpush1.xpose.msra.mxu0 0.0
        %1125 = vmatprep.subr.mxu0 0.0
        %1126 = vmatpush1.xpose.msra.mxu0 0.0
        %1127 = vmatprep.subr.mxu0 0.0
        %1128 = vmatpush1.xpose.msra.mxu0 0.0
        %1129 = vmatprep.subr.mxu0 0.0
        %1130 = vmatpush1.xpose.msra.mxu0 0.0
        %1131 = vmatprep.subr.mxu0 0.0
        %1132 = vmatpush1.xpose.msra.mxu0 0.0
        %1133 = vmatprep.subr.mxu0 0.0
        %1134 = vmatpush1.xpose.msra.mxu0 0.0
        %1135 = vmatprep.subr.mxu0 0.0
        %1136 = vmatpush1.xpose.msra.mxu0 0.0
        %1137 = vmatprep.mubr.f32.mxu0 0.0
        %1138 = vmatmul.mubr.f32.gmra.mrb[0].mxu0 %v1069
        %v1139 = vpop.f32.mrb[0].mxu0
        %v1140 = vadd.f32 0.0, %v1139
        %v1141 = vpop.f32.mrb[0].mxu0
        %1142 = vdwg.mxu0
        %s1143 = scalar_lea.vmem [#allocation3], 24
        %v1144 = vld [vmem:[%s1143] sm:$0xff]
        %v1145 = vsel %vm563, %v1140, -inf
        %1146 = vmax.xlane.f32.xlu0 %v1145
        %v1147 = vpop.xlane.xlu0 %1146
        %v1148 = vmax.f32 %v1144, %v1147
        %v1149 = vsub.f32 %v1144, %v1148
        %v1150 = vmul.f32 %v1149, 1.442695
        %v1151 = vpow.pop %v1150
        %1153 = vset.pattern.permute.xlu0 0
        %1154 = vperm.xlu0 %1153, %v1148
        %v1155 = vpop.permute.xlu0 %1154
        %v1157 = vsub.f32 %v1140, %v1155
        %v1158 = vmul.f32 %v1157, 1.442695
        %v1159 = vpow.pop %v1158
        %s1160 = scalar_lea.vmem [#allocation4], 24
        %v1161 = vld [vmem:[%s1160] sm:$0xff]
        %v1162 = vmul.f32 %v1151, %v1161
        %v1163 = vsel %vm563, %v1159, 0.0
        %1164 = vadd.xlane.f32.xlu0 %v1163
        %v1165 = vpop.xlane.xlu0 %1164
        %v1166 = vadd.f32 %v1162, %v1165
        %1167 = vst.msk [vmem:[%s1160] sm:$0xff] %vm585, %v1166
        %1168 = vrot.lane.b32.xlu0 %v483, 32
        %v1169 = vpop.permute.xlu0 %1168
        %v1172 = vsel %vm563, %v1159, 0
        %1174 = vmatprep.subr.mxu0 0.0
        %1175 = vmatpush1.msra.mxu0 %v1169
        %1176 = vmatprep.subr.mxu0 0.0
        %1177 = vmatpush1.msra.mxu0 0.0
        %1178 = vmatprep.subr.mxu0 0.0
        %1179 = vmatpush1.msra.mxu0 0.0
        %1180 = vmatprep.subr.mxu0 0.0
        %1181 = vmatpush1.msra.mxu0 0.0
        %1182 = vmatprep.subr.mxu0 0.0
        %1183 = vmatpush1.msra.mxu0 0.0
        %1184 = vmatprep.subr.mxu0 0.0
        %1185 = vmatpush1.msra.mxu0 0.0
        %1186 = vmatprep.subr.mxu0 0.0
        %1187 = vmatpush1.msra.mxu0 0.0
        %1188 = vmatprep.subr.mxu0 0.0
        %1189 = vmatpush1.msra.mxu0 0.0
        %1190 = vmatprep.subr.mxu0 0.0
        %1191 = vmatpush1.msra.mxu0 0.0
        %1192 = vmatprep.subr.mxu0 0.0
        %1193 = vmatpush1.msra.mxu0 0.0
        %1194 = vmatprep.subr.mxu0 0.0
        %1195 = vmatpush1.msra.mxu0 0.0
        %1196 = vmatprep.subr.mxu0 0.0
        %1197 = vmatpush1.msra.mxu0 0.0
        %1198 = vmatprep.subr.mxu0 0.0
        %1199 = vmatpush1.msra.mxu0 0.0
        %1200 = vmatprep.subr.mxu0 0.0
        %1201 = vmatpush1.msra.mxu0 0.0
        %1202 = vmatprep.subr.mxu0 0.0
        %1203 = vmatpush1.msra.mxu0 0.0
        %1204 = vmatprep.subr.mxu0 0.0
        %1205 = vmatpush1.msra.mxu0 0.0
        %1206 = vmatprep.subr.mxu0 0.0
        %1207 = vmatpush1.msra.mxu0 0.0
        %1208 = vmatprep.subr.mxu0 0.0
        %1209 = vmatpush1.msra.mxu0 0.0
        %1210 = vmatprep.subr.mxu0 0.0
        %1211 = vmatpush1.msra.mxu0 0.0
        %1212 = vmatprep.subr.mxu0 0.0
        %1213 = vmatpush1.msra.mxu0 0.0
        %1214 = vmatprep.subr.mxu0 0.0
        %1215 = vmatpush1.msra.mxu0 0.0
        %1216 = vmatprep.subr.mxu0 0.0
        %1217 = vmatpush1.msra.mxu0 0.0
        %1218 = vmatprep.subr.mxu0 0.0
        %1219 = vmatpush1.msra.mxu0 0.0
        %1220 = vmatprep.subr.mxu0 0.0
        %1221 = vmatpush1.msra.mxu0 0.0
        %1222 = vmatprep.subr.mxu0 0.0
        %1223 = vmatpush1.msra.mxu0 0.0
        %1224 = vmatprep.subr.mxu0 0.0
        %1225 = vmatpush1.msra.mxu0 0.0
        %1226 = vmatprep.subr.mxu0 0.0
        %1227 = vmatpush1.msra.mxu0 0.0
        %1228 = vmatprep.subr.mxu0 0.0
        %1229 = vmatpush1.msra.mxu0 0.0
        %1230 = vmatprep.subr.mxu0 0.0
        %1231 = vmatpush1.msra.mxu0 0.0
        %1232 = vmatprep.subr.mxu0 0.0
        %1233 = vmatpush1.msra.mxu0 0.0
        %1234 = vmatprep.subr.mxu0 0.0
        %1235 = vmatpush1.msra.mxu0 0.0
        %1236 = vmatprep.subr.mxu0 0.0
        %1237 = vmatpush1.msra.mxu0 0.0
        %1238 = vmatprep.mubr.f32.mxu0 0.0
        %1239 = vmatmul.mubr.f32.gmra.mrb[0].mxu0 %v1172
        %v1240 = vpop.f32.mrb[0].mxu0
        %v1241 = vadd.f32 0.0, %v1240
        %v1242 = vpop.f32.mrb[0].mxu0
        %1243 = vdwg.mxu0
        %v1244 = vld [vmem:[#allocation5] sm:$0xff]
        %1246 = vset.pattern.permute.xlu0 0
        %1247 = vperm.xlu0 %1246, %v1151
        %v1248 = vpop.permute.xlu0 %1247
        %v1250 = vmul.f32 %v1248, %v1244
        %1252 = vrot.lane.b32.xlu0 %v1241, 96
        %v1253 = vpop.permute.xlu0 %1252
        %v1255 = vadd.f32 %v1250, %v1253
        %vm1256 = vcmask 1048320
        %1257 = vst.msk [vmem:[#allocation5] sm:$0xff] %vm1256, %v1255
        %1258 = vst.msk [vmem:[%s1143] sm:$0xff] %vm585, %v1148
        // Predicated region
        $region49: #{tpu_custom_call.1} parent=43 // pred_check
          %p1259 = pneg %p307
        $region50: #{tpu_custom_call.1} parent=43 // pred_check_branch
          %1261 = sbr.rel (%p1259) target = $region52
        $region51: #{tpu_custom_call.1} parent=43 // pred_region
          %v1262 = vld [vmem:[#allocation4] sm:$0xff]
          %v1263 = vrcp.pop %v1262
          %v1264 = vld [vmem:[#allocation5] sm:$0xff]
          %1266 = vset.pattern.permute.xlu0 0
          %1267 = vperm.xlu0 %1266, %v1263
          %v1268 = vpop.permute.xlu0 %1267
          %v1270 = vmul.f32 %v1264, %v1268
          %1271 = vst.msk [vmem:[#allocation5] sm:$0xff] %vm410, %v1270
          %v1272 = vld [vmem:[%s767] sm:$0xff]
          %v1273 = vrcp.pop %v1272
          %v1274 = vld [vmem:[#allocation5] sm:$0xff]
          %1276 = vset.pattern.permute.xlu0 0
          %1277 = vperm.xlu0 %1276, %v1273
          %v1278 = vpop.permute.xlu0 %1277
          %v1280 = vmul.f32 %v1274, %v1278
          %1281 = vst.msk [vmem:[#allocation5] sm:$0xff] %vm864, %v1280
          %v1282 = vld [vmem:[%s964] sm:$0xff]
          %v1283 = vrcp.pop %v1282
          %v1284 = vld [vmem:[#allocation5] sm:$0xff]
          %1286 = vset.pattern.permute.xlu0 0
          %1287 = vperm.xlu0 %1286, %v1283
          %v1288 = vpop.permute.xlu0 %1287
          %v1290 = vmul.f32 %v1284, %v1288
          %1291 = vst.msk [vmem:[#allocation5] sm:$0xff] %vm1060, %v1290
          %v1292 = vld [vmem:[%s1160] sm:$0xff]
          %v1293 = vrcp.pop %v1292
          %v1294 = vld [vmem:[#allocation5] sm:$0xff]
          %1296 = vset.pattern.permute.xlu0 0
          %1297 = vperm.xlu0 %1296, %v1293
          %v1298 = vpop.permute.xlu0 %1297
          %v1300 = vmul.f32 %v1294, %v1298
          %1301 = vst.msk [vmem:[#allocation5] sm:$0xff] %vm1256, %v1300
          %v1302 = vld [vmem:[#allocation5] sm:$0xff]
          %v1303 = vld [vmem:[%s4] sm:$0xff]
          %v1304 = vld [vmem:[%s4 + $0x8] sm:$0xff]
          %v1305 = vld [vmem:[%s4 + $0x10] sm:$0xff]
          %v1306 = vld [vmem:[%s4 + $0x18] sm:$0xff]
          %v1307 = vld [vmem:[%s4 + $0x20] sm:$0xff]
          %v1308 = vld [vmem:[%s4 + $0x28] sm:$0xff]
          %v1309 = vld [vmem:[%s4 + $0x30] sm:$0xff]
          %v1310 = vld [vmem:[%s4 + $0x38] sm:$0xff]
          %v1311 = vld [vmem:[%s4 + $0x40] sm:$0xff]
          %v1312 = vld [vmem:[%s4 + $0x48] sm:$0xff]
          %v1313 = vld [vmem:[%s4 + $0x50] sm:$0xff]
          %v1314 = vld [vmem:[%s4 + $0x58] sm:$0xff]
          %v1315 = vld [vmem:[%s4 + $0x60] sm:$0xff]
          %v1316 = vld [vmem:[%s4 + $0x68] sm:$0xff]
          %v1317 = vld [vmem:[%s4 + $0x70] sm:$0xff]
          %v1318 = vld [vmem:[%s4 + $0x78] sm:$0xff]
          %v1319 = vld [vmem:[%s5] sm:$0x1]
          %v1321 = vlaneseq
          %v1322 = vshrl.u32 %v1321, 7
          %v1323 = vsub.s32 0, %v1322
          %v1324 = vrot.slane %v1319, %v1323
          %1326 = vmatprep.subr.mxu0 0.0
          %1327 = vmatpush1.msra.mxu0 %v1303
          %1328 = vmatprep.subr.mxu0 0.0
          %1329 = vmatpush1.msra.mxu0 %v1304
          %1330 = vmatprep.subr.mxu0 0.0
          %1331 = vmatpush1.msra.mxu0 %v1305
          %1332 = vmatprep.subr.mxu0 0.0
          %1333 = vmatpush1.msra.mxu0 %v1306
          %1334 = vmatprep.subr.mxu0 0.0
          %1335 = vmatpush1.msra.mxu0 %v1307
          %1336 = vmatprep.subr.mxu0 0.0
          %1337 = vmatpush1.msra.mxu0 %v1308
          %1338 = vmatprep.subr.mxu0 0.0
          %1339 = vmatpush1.msra.mxu0 %v1309
          %1340 = vmatprep.subr.mxu0 0.0
          %1341 = vmatpush1.msra.mxu0 %v1310
          %1342 = vmatprep.subr.mxu0 0.0
          %1343 = vmatpush1.msra.mxu0 %v1311
          %1344 = vmatprep.subr.mxu0 0.0
          %1345 = vmatpush1.msra.mxu0 %v1312
          %1346 = vmatprep.subr.mxu0 0.0
          %1347 = vmatpush1.msra.mxu0 %v1313
          %1348 = vmatprep.subr.mxu0 0.0
          %1349 = vmatpush1.msra.mxu0 %v1314
          %1350 = vmatprep.subr.mxu0 0.0
          %1351 = vmatpush1.msra.mxu0 %v1315
          %1352 = vmatprep.subr.mxu0 0.0
          %1353 = vmatpush1.msra.mxu0 %v1316
          %1354 = vmatprep.subr.mxu0 0.0
          %1355 = vmatpush1.msra.mxu0 %v1317
          %1356 = vmatprep.subr.mxu0 0.0
          %1357 = vmatpush1.msra.mxu0 %v1318
          %1358 = vmatprep.subr.mxu0 0.0
          %1359 = vmatpush1.msra.mxu0 0.0
          %1360 = vmatprep.subr.mxu0 0.0
          %1361 = vmatpush1.msra.mxu0 0.0
          %1362 = vmatprep.subr.mxu0 0.0
          %1363 = vmatpush1.msra.mxu0 0.0
          %1364 = vmatprep.subr.mxu0 0.0
          %1365 = vmatpush1.msra.mxu0 0.0
          %1366 = vmatprep.subr.mxu0 0.0
          %1367 = vmatpush1.msra.mxu0 0.0
          %1368 = vmatprep.subr.mxu0 0.0
          %1369 = vmatpush1.msra.mxu0 0.0
          %1370 = vmatprep.subr.mxu0 0.0
          %1371 = vmatpush1.msra.mxu0 0.0
          %1372 = vmatprep.subr.mxu0 0.0
          %1373 = vmatpush1.msra.mxu0 0.0
          %1374 = vmatprep.subr.mxu0 0.0
          %1375 = vmatpush1.msra.mxu0 0.0
          %1376 = vmatprep.subr.mxu0 0.0
          %1377 = vmatpush1.msra.mxu0 0.0
          %1378 = vmatprep.subr.mxu0 0.0
          %1379 = vmatpush1.msra.mxu0 0.0
          %1380 = vmatprep.subr.mxu0 0.0
          %1381 = vmatpush1.msra.mxu0 0.0
          %1382 = vmatprep.subr.mxu0 0.0
          %1383 = vmatpush1.msra.mxu0 0.0
          %1384 = vmatprep.subr.mxu0 0.0
          %1385 = vmatpush1.msra.mxu0 0.0
          %1386 = vmatprep.subr.mxu0 0.0
          %1387 = vmatpush1.msra.mxu0 0.0
          %1388 = vmatprep.subr.mxu0 0.0
          %1389 = vmatpush1.msra.mxu0 0.0
          %1390 = vmatprep.mubr.f32.mxu0 0.0
          %1391 = vmatmul.mubr.f32.gmra.mrb[0].mxu0 %v1302
          %v1392 = vpop.f32.mrb[0].mxu0
          %v1393 = vadd.f32 %v1324, %v1392
          %v1394 = vpop.f32.mrb[0].mxu0
          %1395 = vdwg.mxu0
          %1396 = vst.msk [vmem:[%s292] sm:$0xff] %vm410, %v1393
        $region52: #{tpu_custom_call.1} parent=43 // pred_fallthru
          _
        %s1397 = sand.u32 %s189, 1
        %s1398 = scalar_lea.sflag [#allocation7], %s1397
        %s1399 = sand.u32 %s189, 1
        %s1400 = smul.addr %s1399, 8
        %s1401 = scalar_lea.vmem [#allocation6], %s1400
        // Predicated region
        $region53: #{tpu_custom_call.1} parent=43 // pred_check
          %p1402 = pneg %p199
        $region54: #{tpu_custom_call.1} parent=43 // pred_check_branch
          %1404 = sbr.rel (%p1402) target = $region56
        $region55: #{tpu_custom_call.1} parent=43 // pred_region
          %s1406 = ssub.s32 128, 128
          %1407 = vsyncadd %s1398, %s1406
          %s1408 = sadd.s32 %s26, %s25
          %s1409 = smul.addr %s1408, 128
          %s1410 = scalar_lea.hbm %s6, %s1409
          %s1412 = sshll.u32 %s1401, 4
          %s1413 = int_to_ptr.vmem [resolvable:$true] %s1412
          %1415 = dma.vmem_to_hbm [thread:$0]  %s1413, 128, %s1410, %s1398
        $region56: #{tpu_custom_call.1} parent=43 // pred_fallthru
          _
      $region44: #{tpu_custom_call.1} parent=5 // pred_fallthru
        _
      %p1416 = scmp.le.s32.totalorder 2, %s15
      // Predicated region
      $region57: #{tpu_custom_call.1} parent=5 // pred_check
        %p1417 = pneg %p1416
      $region58: #{tpu_custom_call.1} parent=5 // pred_check_branch
        %1419 = sbr.rel (%p1417) target = $region60
      $region59: #{tpu_custom_call.1} parent=5 // pred_region
        %s1420 = ssub.s32 %s15, 2
        // Predicated region
        $region61: #{tpu_custom_call.1} parent=59 // pred_check
          %p1421 = pneg %p205
        $region62: #{tpu_custom_call.1} parent=59 // pred_check_branch
          %1423 = sbr.rel (%p1421) target = $region64
        $region63: #{tpu_custom_call.1} parent=59 // pred_region
          %s1424 = sand.u32 %s190, 1
          %s1425 = scalar_lea.sflag [#allocation7], %s1424
          %s1426 = sand.u32 %s190, 1
          %s1427 = smul.addr %s1426, 8
          %s1428 = scalar_lea.vmem [#allocation6], %s1427
          %1429 = dma.done %s1425, 128
        $region64: #{tpu_custom_call.1} parent=59 // pred_fallthru
          _
      $region60: #{tpu_custom_call.1} parent=5 // pred_fallthru
        _
    $region6: #{tpu_custom_call.1} parent=1 // loop_footer
      %s19 = sadd.s32 1, %s15
    $region7: #{tpu_custom_call.1} parent=1 // loop_footer_branch
      %14 = sbr.rel target = $region3
    $region8: #{tpu_custom_call.1} parent=1 // loop_exit
      _
    %1430 = vsyncpa [#allocation7], 1
    %s1431 = scalar_lea.sflag [#allocation7], 1
    %1432 = vsyncpa %s1431, 1

</llo_original>
